<compile_context>
chip_gen: v5e
topology: v5e:2x2
jax: 0.10.0
libtpu: 0.0.40
codegen_flags: <defaults>
</compile_context>

<pallas_src>
import functools

import jax
import jax.numpy as jnp
from jax import lax
from jax.experimental import pallas as pl
from jax.experimental.pallas import tpu as pltpu


def _round_up(x, m):
    return (x + m - 1) // m * m


def temporal_block_kernel(x_ref, w1_ref, b1_ref, w2_ref, b2_ref, out_ref,
                          *, K1, d1, K2, d2, C1p, per_tap):
    """Fused TemporalBlock forward for NB whole sequences.

    Refs (lane-dense, channel dims zero-padded to multiples of 128):
      x_ref  : (NB, Lp, C0p)         input block (f32 or bf16)
      w1_ref : (K1*C0p, C1p + C2p)   conv1 weights (im2col rows) with the 1x1
                                     downsample fused as extra output columns
                                     (its rows sit in the zero-shift tap block)
      b1_ref : (1, C1p + C2p)        [b1 | bd]
      w2_ref : (K2*C1p, C2p)         conv2 weights, im2col layout
      b2_ref : (1, C2p)
      out_ref: (NB, Lp, C2p)         f32 output
    """
    NB, Lp, C0p = x_ref.shape
    C2p = out_ref.shape[2]
    M = NB * Lp

    # Elementwise path stays f32 regardless of the matmul operand dtype.
    x = x_ref[...].astype(jnp.float32).reshape(M, C0p)

    # Hoisted once per body (shape (M,1), not per tap / per lane):
    # (t mod Lp) of the flattened row index -> cheap per-tap masks.
    t_mod = lax.broadcasted_iota(jnp.int32, (M, 1), 0) % Lp

    def causal_shift(a, s):
        # Row t of the result holds row t-s of the SAME sequence; rows whose
        # (t mod Lp) < s read the causal zero padding ("conv pad + chomp").
        if s == 0:
            return a
        if s >= Lp:
            return jnp.zeros_like(a)
        rolled = pltpu.roll(a, shift=s, axis=0)
        return jnp.where(t_mod >= s, rolled, jnp.zeros_like(rolled))

    def dilated_causal_conv(a, w_ref, b_ref, K, d):
        wdt = w_ref.dtype
        cin = a.shape[1]
        if per_tap:
            # Per-tap accumulation: no im2col slab (v5e-friendly, 1 vst slot).
            acc = None
            for k in range(K):
                col = causal_shift(a, (K - 1 - k) * d).astype(wdt)
                part = jnp.dot(col, w_ref[k * cin:(k + 1) * cin, :],
                               preferred_element_type=jnp.float32)
                acc = part if acc is None else acc + part
            return acc + b_ref[...]
        # im2col over the K taps -> a single MXU matmul.  Each tap column is
        # cast to the matmul dtype BEFORE the concatenate, so the slab is
        # built at operand width (halves concat VMEM/ld-st traffic for bf16).
        cols = [causal_shift(a, (K - 1 - k) * d).astype(wdt) for k in range(K)]
        a_cat = cols[0] if K == 1 else jnp.concatenate(cols, axis=1)
        return jnp.dot(a_cat, w_ref[...],
                       preferred_element_type=jnp.float32) + b_ref[...]

    # Conv1 + fused residual: output columns [0:C1p] are conv1, [C1p:] are the
    # 1x1 downsample of x (zero-shift tap rows) -> fills a 256-wide MXU.
    y1 = dilated_causal_conv(x, w1_ref, b1_ref, K1, d1)      # (M, C1p + C2p)
    h1 = jnp.maximum(y1[:, :C1p], 0.0)   # conv + chomp + ReLU (+ eval dropout)
    res = y1[:, C1p:]

    # Sub-block 2 (h1 stays in vregs; no VMEM scratch round trip).
    h2 = jnp.maximum(dilated_causal_conv(h1, w2_ref, b2_ref, K2, d2), 0.0)

    out = jnp.maximum(h2 + res, 0.0)
    out_ref[...] = out.reshape(NB, Lp, C2p).astype(out_ref.dtype)


def temporal_block_forward(x_ncl, w1, b1, d1, w2, b2, d2, wd, bd, *,
                           use_bf16_matmul=False, per_tap_matmul=False,
                           rows_per_step=1024, single_buffer_weights=True):
    """TemporalBlock forward (eval mode).

    x_ncl: (N, C0, L) in PyTorch Conv1d layout.
    w1: (K1, C0, C1), w2: (K2, C1, C2) in (K, C_in, C_out) layout;
    wd: (C0, C2) 1x1 downsample (or None when C0 == C2); biases are 1-D.
    use_bf16_matmul: bf16 MXU operands + bf16 x in HBM (f32 accumulation and
      f32 elementwise path).  A win on every TPU generation (f32 matmuls cost
      multiple MXU passes) and halves input DMA bytes.  NOTE: the fused
      residual matmul is also bf16 in this mode.
    per_tap_matmul: accumulate per-tap dots instead of building the im2col
      slab (preferred on v5e, which has a single vector-store slot).
    """
    N, C0, L = x_ncl.shape
    K1, _, C1 = w1.shape
    K2, _, C2 = w2.shape

    if wd is None:                      # no downsample => identity residual
        assert C0 == C2
        wd = jnp.eye(C0, dtype=jnp.float32)
        bd = jnp.zeros((C2,), jnp.float32)

    # Lane-dense channel padding (multiples of 128); time padded to x8 so the
    # (NB,Lp,C) <-> (M,C) reshapes and sublane rolls never cross tile bounds.
    C0p, C1p, C2p = (_round_up(c, 128) for c in (C0, C1, C2))
    Lp = _round_up(max(L, 1), 8)

    x_bytes = 2 if use_bf16_matmul else 4
    w_bytes = x_bytes

    def est_vmem(nb):
        m = nb * Lp
        x_blk = 2 * m * C0p * x_bytes                      # double-buffered in
        out_blk = 2 * m * C2p * 4                          # double-buffered out
        w_blk = 2 * ((K1 * C0p) * (C1p + C2p) + (K2 * C1p) * C2p) * w_bytes
        interm = ((m * K1 * C0p + m * K2 * C1p) * w_bytes  # im2col slabs
                  + m * (C1p + C2p) * 4 + m * C1p * 4 + 2 * m * C2p * 4)
        return x_blk + out_blk + w_blk + interm

    # Batch elements per grid step: fold NB sequences into one matmul M dim.
    # TODO(synk): for L >> rows_per_step add an L-tiling path with a (K-1)*d
    # halo (or VMEM-carried tail rows) instead of one whole sequence per step.
    NB = max(1, min(N, rows_per_step // Lp))
    if N >= 2 and _round_up(N, NB) // NB < 2:
        NB = (N + 1) // 2            # grid >= 2: let v7x use both TensorCores
    VMEM_BUDGET = 48 * 1024 * 1024   # headroom under v7x's 64 MiB physical VMEM
    while NB > 1 and est_vmem(NB) > VMEM_BUDGET:
        NB = max(1, NB // 2)
    Npad = _round_up(N, NB)
    vmem_limit = int(min(64 * 1024 * 1024,
                         max(32 * 1024 * 1024, 1.25 * est_vmem(NB))))

    wdtype = jnp.bfloat16 if use_bf16_matmul else jnp.float32
    xdtype = wdtype                       # bf16 x in HBM halves input DMA

    x_nlc = jnp.transpose(x_ncl, (0, 2, 1))                        # (N, L, C0)
    x_p = jnp.pad(x_nlc, ((0, Npad - N), (0, Lp - L), (0, C0p - C0)))
    x_p = x_p.astype(xdtype)
    # TODO(synk): for tiny C0 (e.g. 4) most of this DMA is zero padding; a
    # block-Toeplitz lane packing (timesteps x channels in the lane dim) or
    # in-kernel padding would cut input HBM traffic by ~C0p/C0.

    def pad_conv_w(w, cin_p, cout_p):
        wp = jnp.pad(w, ((0, 0), (0, cin_p - w.shape[1]),
                         (0, cout_p - w.shape[2])))
        return wp.reshape(w.shape[0] * cin_p, cout_p)      # im2col row layout

    w1_f = pad_conv_w(w1, C0p, C1p)                             # (K1*C0p, C1p)
    wd_p = jnp.pad(wd, ((0, C0p - C0), (0, C2p - C2)))
    wd_rows = jnp.zeros((K1 * C0p, C2p), jnp.float32)
    wd_rows = wd_rows.at[(K1 - 1) * C0p:K1 * C0p, :].set(wd_p)  # zero-shift tap
    w1c = jnp.concatenate([w1_f, wd_rows], axis=1).astype(wdtype)
    w2_f = pad_conv_w(w2, C1p, C2p).astype(wdtype)              # (K2*C1p, C2p)

    b1_p = jnp.pad(b1.reshape(1, -1), ((0, 0), (0, C1p - C1)))
    bd_p = jnp.pad(bd.reshape(1, -1), ((0, 0), (0, C2p - C2)))
    b1c = jnp.concatenate([b1_p, bd_p], axis=1).astype(jnp.float32)
    b2_p = jnp.pad(b2.reshape(1, -1), ((0, 0), (0, C2p - C2))).astype(jnp.float32)

    kernel = functools.partial(temporal_block_kernel, K1=K1, d1=d1,
                               K2=K2, d2=d2, C1p=C1p, per_tap=per_tap_matmul)

    def call(weight_buffers):
        def invariant_spec(shape):
            # Grid-invariant blocks: re-DMA is already skipped; single-buffer
            # them to free VMEM (matters most on v7x's 64 MiB).
            if weight_buffers == 1:
                return pl.BlockSpec(shape, lambda n: (0, 0),
                                    pipeline_mode=pl.Buffered(1))
            return pl.BlockSpec(shape, lambda n: (0, 0))

        return pl.pallas_call(
            kernel,
            out_shape=jax.ShapeDtypeStruct((Npad, Lp, C2p), jnp.float32),
            grid_spec=pltpu.PrefetchScalarGridSpec(
                num_scalar_prefetch=0,
                grid=(Npad // NB,),
                in_specs=[
                    pl.BlockSpec((NB, Lp, C0p), lambda n: (n, 0, 0)),  # x
                    invariant_spec((K1 * C0p, C1p + C2p)),             # w1|wd
                    invariant_spec((1, C1p + C2p)),                    # b1|bd
                    invariant_spec((K2 * C1p, C2p)),                   # w2
                    invariant_spec((1, C2p)),                          # b2
                ],
                out_specs=pl.BlockSpec((NB, Lp, C2p), lambda n: (n, 0, 0)),
            ),
            compiler_params=pltpu.CompilerParams(
                dimension_semantics=("parallel",),   # independent batch tiles
                vmem_limit_bytes=vmem_limit),
        )(x_p, w1c, b1c, w2_f, b2_p)

    if single_buffer_weights:
        try:
            out = jax.block_until_ready(call(1))
        except Exception:
            # Some Pallas versions reject pl.Buffered(1); fall back to the
            # default double-buffered pipeline for the invariant weights.
            out = jax.block_until_ready(call(2))
    else:
        out = jax.block_until_ready(call(2))

    out = out[:N, :L, :C2]                 # drop batch / time / channel padding
    return jnp.transpose(out, (0, 2, 1))   # back to (N, C2, L)


# ----------------------- deterministic parameter setup -----------------------

def _xavier_uniform(key, shape, fan_in, fan_out):
    bound = (6.0 / (fan_in + fan_out)) ** 0.5
    return jax.random.uniform(key, shape, jnp.float32, -bound, bound)


def make_conv1d_params(key, c_in, c_out, k, weight_norm=True):
    """Effective weight in PyTorch OIK layout (C_out, C_in, K) plus bias."""
    kv, kg, kb = jax.random.split(key, 3)
    v = _xavier_uniform(kv, (c_out, c_in, k), c_in * k, c_out * k)
    if weight_norm:
        g = jax.random.uniform(kg, (c_out, 1, 1), jnp.float32, 0.5, 1.5)
        norm = jnp.sqrt(jnp.sum(v * v, axis=(1, 2), keepdims=True))
        w = g * v / norm
    else:
        w = v
    b_bound = 1.0 / (c_in * k) ** 0.5
    b = jax.random.uniform(kb, (c_out,), jnp.float32, -b_bound, b_bound)
    return w, b


# ---------------------------- pure-JAX reference -----------------------------

def ref_temporal_block(x, w1_oik, b1, d1, w2_oik, b2, d2, wd_oik, bd):
    def causal_conv(xx, w, b, d):
        k = w.shape[2]
        pad = (k - 1) * d
        y = lax.conv_general_dilated(
            xx, w, window_strides=(1,), padding=[(pad, 0)],
            rhs_dilation=(d,), dimension_numbers=('NCH', 'OIH', 'NCH'))
        return y + b[None, :, None]

    h = jnp.maximum(causal_conv(x, w1_oik, b1, d1), 0.0)   # conv+chomp+relu
    h = jnp.maximum(causal_conv(h, w2_oik, b2, d2), 0.0)
    res = lax.conv_general_dilated(
        x, wd_oik, window_strides=(1,), padding=[(0, 0)],
        dimension_numbers=('NCH', 'OIH', 'NCH')) + bd[None, :, None]
    return jnp.maximum(h + res, 0.0)


if __name__ == "__main__":
    # TemporalBlock(conv_channel_sizes=[4, 8, 8], kernel_sizes=[3, 3],
    #               strides=[1, 1], paddings=[2, 4], dilations=[1, 2],
    #               dropouts=[0.2, 0.2], weight_norm=True, activation='relu')
    N, C0, C1, C2, L = 2, 4, 8, 8, 16
    K1, K2 = 3, 3
    d1, d2 = 1, 2

    key = jax.random.PRNGKey(0)
    kx, k1, k2, kd = jax.random.split(key, 4)

    x = jax.random.normal(kx, (N, C0, L), jnp.float32)

    w1_oik, b1 = make_conv1d_params(k1, C0, C1, K1, weight_norm=True)
    w2_oik, b2 = make_conv1d_params(k2, C1, C2, K2, weight_norm=True)
    wd_oik, bd = make_conv1d_params(kd, C0, C2, 1, weight_norm=False)  # downsample

    # Kernel-layout weights: (K, C_in, C_out); 1x1 conv as (C_in, C_out).
    w1_k = jnp.transpose(w1_oik, (2, 1, 0))
    w2_k = jnp.transpose(w2_oik, (2, 1, 0))
    wd_k = jnp.transpose(wd_oik[:, :, 0], (1, 0))

    ref = ref_temporal_block(x, w1_oik, b1, d1, w2_oik, b2, d2, wd_oik, bd)

    # f32 MXU path (fused im2col): must match the f32 reference tightly.
    out = temporal_block_forward(x, w1_k, b1, d1, w2_k, b2, d2, wd_k, bd,
                                 use_bf16_matmul=False)
    out = jax.block_until_ready(out)
    assert out.shape == (N, C2, L)
    assert jnp.allclose(out, ref, atol=1e-4, rtol=1e-4), \
        f"f32 max abs diff = {jnp.max(jnp.abs(out - ref))}"

    # Per-tap accumulation variant (v5e-friendly): also f32-tight.
    out_pt = temporal_block_forward(x, w1_k, b1, d1, w2_k, b2, d2, wd_k, bd,
                                    use_bf16_matmul=False, per_tap_matmul=True)
    out_pt = jax.block_until_ready(out_pt)
    assert jnp.allclose(out_pt, ref, atol=1e-4, rtol=1e-4), \
        f"per-tap max abs diff = {jnp.max(jnp.abs(out_pt - ref))}"

    # bf16-operand MXU path (perf option on all generations): loose check.
    out_bf16 = temporal_block_forward(x, w1_k, b1, d1, w2_k, b2, d2, wd_k, bd,
                                      use_bf16_matmul=True)
    out_bf16 = jax.block_until_ready(out_bf16)
    assert jnp.max(jnp.abs(out_bf16 - ref)) < 0.5, \
        f"bf16 max abs diff = {jnp.max(jnp.abs(out_bf16 - ref))}"

    print("KERNEL_OK")
</pallas_src>

<mosaic_0001>
module attributes {stable_mosaic.version = 11 : i64} {
  func.func @temporal_block_kernel(%arg0: i32, %arg1: memref<1x16x128xf32, #tpu.memory_space<vmem>>, %arg2: memref<384x256xf32, #tpu.memory_space<vmem>>, %arg3: memref<1x256xf32, #tpu.memory_space<vmem>>, %arg4: memref<384x128xf32, #tpu.memory_space<vmem>>, %arg5: memref<1x128xf32, #tpu.memory_space<vmem>>, %arg6: memref<1x16x128xf32, #tpu.memory_space<vmem>>) attributes {dimension_semantics = [#tpu.dimension_semantics<parallel>], iteration_bounds = array<i64: 2>, scalar_prefetch = 0 : i64, scratch_operands = 0 : i64, tpu.core_type = #tpu.core_type<tc>, window_params = [{transform_indices = @transform_0, window_bounds = array<i64: 1, 16, 128>}, {pipeline_mode = #tpu.pipeline_mode<synchronous>, transform_indices = @transform_1, window_bounds = array<i64: 384, 256>}, {pipeline_mode = #tpu.pipeline_mode<synchronous>, transform_indices = @transform_2, window_bounds = array<i64: 1, 256>}, {pipeline_mode = #tpu.pipeline_mode<synchronous>, transform_indices = @transform_3, window_bounds = array<i64: 384, 128>}, {pipeline_mode = #tpu.pipeline_mode<synchronous>, transform_indices = @transform_4, window_bounds = array<i64: 1, 128>}, {transform_indices = @transform_5, window_bounds = array<i64: 1, 16, 128>}]} {
    %c0 = arith.constant 0 : index
    %c0_0 = arith.constant 0 : index
    %c0_1 = arith.constant 0 : index
    %0 = vector.load %arg1[%c0, %c0_0, %c0_1] : memref<1x16x128xf32, #tpu.memory_space<vmem>>, vector<1x16x128xf32>
    %1 = vector.shape_cast %0 : vector<1x16x128xf32> to vector<16x128xf32>
    %2 = tpu.iota {dimensions = array<i32: 0>} : vector<16x1xi32>
    %c16_i32 = arith.constant 16 : i32
    %c0_i32 = arith.constant 0 : i32
    %3 = arith.cmpi eq, %c16_i32, %c0_i32 : i32
    %c1_i32 = arith.constant 1 : i32
    %4 = arith.select %3, %c1_i32, %c16_i32 : i32
    %5 = vector.broadcast %4 : i32 to vector<16x1xi32>
    %6 = arith.remsi %2, %5 : vector<16x1xi32>
    %c0_i32_2 = arith.constant 0 : i32
    %7 = vector.broadcast %c0_i32_2 : i32 to vector<16x1xi32>
    %8 = arith.cmpi ne, %6, %7 : vector<16x1xi32>
    %c0_i32_3 = arith.constant 0 : i32
    %9 = vector.broadcast %c0_i32_3 : i32 to vector<16x1xi32>
    %10 = arith.cmpi slt, %6, %9 : vector<16x1xi32>
    %c0_i32_4 = arith.constant 0 : i32
    %11 = arith.cmpi slt, %4, %c0_i32_4 : i32
    %12 = vector.broadcast %11 : i1 to vector<16x1xi1>
    %13 = vector.broadcast %12 : vector<16x1xi1> to vector<16x1xi1>
    %14 = arith.xori %10, %13 : vector<16x1xi1>
    %15 = arith.andi %14, %8 : vector<16x1xi1>
    %16 = vector.broadcast %4 : i32 to vector<16x1xi32>
    %17 = arith.addi %6, %16 : vector<16x1xi32>
    %18 = arith.select %15, %17, %6 : vector<16x1xi1>, vector<16x1xi32>
    %c2_i32 = arith.constant 2 : i32
    %19 = tpu.dynamic_rotate %1 by %c2_i32 dim 0 : vector<16x128xf32>, i32 -> vector<16x128xf32>
    %c2_i32_5 = arith.constant 2 : i32
    %20 = vector.broadcast %c2_i32_5 : i32 to vector<16x1xi32>
    %21 = arith.cmpi sge, %18, %20 : vector<16x1xi32>
    %cst = arith.constant 0.000000e+00 : f32
    %22 = vector.broadcast %cst : f32 to vector<16x128xf32>
    %23 = vector.shape_cast %21 : vector<16x1xi1> to vector<16x1xi1>
    %24 = vector.broadcast %23 : vector<16x1xi1> to vector<16x128xi1>
    %25 = arith.select %24, %19, %22 : vector<16x128xi1>, vector<16x128xf32>
    %c1_i32_6 = arith.constant 1 : i32
    %26 = tpu.dynamic_rotate %1 by %c1_i32_6 dim 0 : vector<16x128xf32>, i32 -> vector<16x128xf32>
    %c1_i32_7 = arith.constant 1 : i32
    %27 = vector.broadcast %c1_i32_7 : i32 to vector<16x1xi32>
    %28 = arith.cmpi sge, %18, %27 : vector<16x1xi32>
    %cst_8 = arith.constant 0.000000e+00 : f32
    %29 = vector.broadcast %cst_8 : f32 to vector<16x128xf32>
    %30 = vector.shape_cast %28 : vector<16x1xi1> to vector<16x1xi1>
    %31 = vector.broadcast %30 : vector<16x1xi1> to vector<16x128xi1>
    %32 = arith.select %31, %26, %29 : vector<16x128xi1>, vector<16x128xf32>
    %33 = tpu.concatenate %25, %32, %1 in 1 : vector<16x128xf32>, vector<16x128xf32>, vector<16x128xf32> -> vector<16x384xf32>
    %c0_9 = arith.constant 0 : index
    %c0_10 = arith.constant 0 : index
    %34 = vector.load %arg2[%c0_9, %c0_10] : memref<384x256xf32, #tpu.memory_space<vmem>>, vector<384x256xf32>
    %cst_11 = arith.constant dense<0.000000e+00> : vector<16x256xf32>
    %35 = tpu.matmul %33, %34, %cst_11 {dimension_numbers = #tpu.dot_dimension_numbers<[1], [0], [0], [1], [0, 0, 1, 1], [], []>} : vector<16x384xf32>, vector<384x256xf32>, vector<16x256xf32> -> vector<16x256xf32>
    %c0_12 = arith.constant 0 : index
    %c0_13 = arith.constant 0 : index
    %36 = vector.load %arg3[%c0_12, %c0_13] : memref<1x256xf32, #tpu.memory_space<vmem>>, vector<1x256xf32>
    %37 = vector.broadcast %36 : vector<1x256xf32> to vector<16x256xf32>
    %38 = arith.addf %35, %37 : vector<16x256xf32>
    %39 = vector.extract_strided_slice %38 {offsets = [0, 0], sizes = [16, 128], strides = [1, 1]} : vector<16x256xf32> to vector<16x128xf32>
    %cst_14 = arith.constant 0.000000e+00 : f32
    %40 = vector.broadcast %cst_14 : f32 to vector<16x128xf32>
    %41 = arith.maximumf %39, %40 : vector<16x128xf32>
    %42 = vector.extract_strided_slice %38 {offsets = [0, 128], sizes = [16, 128], strides = [1, 1]} : vector<16x256xf32> to vector<16x128xf32>
    %c4_i32 = arith.constant 4 : i32
    %43 = tpu.dynamic_rotate %41 by %c4_i32 dim 0 : vector<16x128xf32>, i32 -> vector<16x128xf32>
    %c4_i32_15 = arith.constant 4 : i32
    %44 = vector.broadcast %c4_i32_15 : i32 to vector<16x1xi32>
    %45 = arith.cmpi sge, %18, %44 : vector<16x1xi32>
    %cst_16 = arith.constant 0.000000e+00 : f32
    %46 = vector.broadcast %cst_16 : f32 to vector<16x128xf32>
    %47 = vector.shape_cast %45 : vector<16x1xi1> to vector<16x1xi1>
    %48 = vector.broadcast %47 : vector<16x1xi1> to vector<16x128xi1>
    %49 = arith.select %48, %43, %46 : vector<16x128xi1>, vector<16x128xf32>
    %c2_i32_17 = arith.constant 2 : i32
    %50 = tpu.dynamic_rotate %41 by %c2_i32_17 dim 0 : vector<16x128xf32>, i32 -> vector<16x128xf32>
    %c2_i32_18 = arith.constant 2 : i32
    %51 = vector.broadcast %c2_i32_18 : i32 to vector<16x1xi32>
    %52 = arith.cmpi sge, %18, %51 : vector<16x1xi32>
    %cst_19 = arith.constant 0.000000e+00 : f32
    %53 = vector.broadcast %cst_19 : f32 to vector<16x128xf32>
    %54 = vector.shape_cast %52 : vector<16x1xi1> to vector<16x1xi1>
    %55 = vector.broadcast %54 : vector<16x1xi1> to vector<16x128xi1>
    %56 = arith.select %55, %50, %53 : vector<16x128xi1>, vector<16x128xf32>
    %57 = tpu.concatenate %49, %56, %41 in 1 : vector<16x128xf32>, vector<16x128xf32>, vector<16x128xf32> -> vector<16x384xf32>
    %c0_20 = arith.constant 0 : index
    %c0_21 = arith.constant 0 : index
    %58 = vector.load %arg4[%c0_20, %c0_21] : memref<384x128xf32, #tpu.memory_space<vmem>>, vector<384x128xf32>
    %cst_22 = arith.constant dense<0.000000e+00> : vector<16x128xf32>
    %59 = tpu.matmul %57, %58, %cst_22 {dimension_numbers = #tpu.dot_dimension_numbers<[1], [0], [0], [1], [0, 0, 1, 1], [], []>} : vector<16x384xf32>, vector<384x128xf32>, vector<16x128xf32> -> vector<16x128xf32>
    %c0_23 = arith.constant 0 : index
    %c0_24 = arith.constant 0 : index
    %60 = vector.load %arg5[%c0_23, %c0_24] : memref<1x128xf32, #tpu.memory_space<vmem>>, vector<1x128xf32>
    %61 = vector.broadcast %60 : vector<1x128xf32> to vector<16x128xf32>
    %62 = arith.addf %59, %61 : vector<16x128xf32>
    %cst_25 = arith.constant 0.000000e+00 : f32
    %63 = vector.broadcast %cst_25 : f32 to vector<16x128xf32>
    %64 = arith.maximumf %62, %63 : vector<16x128xf32>
    %65 = arith.addf %64, %42 : vector<16x128xf32>
    %cst_26 = arith.constant 0.000000e+00 : f32
    %66 = vector.broadcast %cst_26 : f32 to vector<16x128xf32>
    %67 = arith.maximumf %65, %66 : vector<16x128xf32>
    %68 = vector.shape_cast %67 : vector<16x128xf32> to vector<1x16x128xf32>
    %c0_27 = arith.constant 0 : index
    %c0_28 = arith.constant 0 : index
    %c0_29 = arith.constant 0 : index
    %69 = vector.load %arg6[%c0_27, %c0_28, %c0_29] : memref<1x16x128xf32, #tpu.memory_space<vmem>>, vector<1x16x128xf32>
    tpu.vector_store %arg6[%c0_27, %c0_28, %c0_29], %68 {strides = array<i32>} : memref<1x16x128xf32, #tpu.memory_space<vmem>>, vector<1x16x128xf32>,
    return
  }
  func.func @transform_0(%arg0: i32) -> (i32, i32, i32) {
    %c0_i32 = arith.constant 0 : i32
    %c0_i32_0 = arith.constant 0 : i32
    %c0_i32_1 = arith.constant 0 : i32
    return %arg0, %c0_i32, %c0_i32_0 : i32, i32, i32
  }
  func.func @transform_1(%arg0: i32) -> (i32, i32) {
    %c0_i32 = arith.constant 0 : i32
    %c0_i32_0 = arith.constant 0 : i32
    %c0_i32_1 = arith.constant 0 : i32
    return %c0_i32, %c0_i32_0 : i32, i32
  }
  func.func @transform_2(%arg0: i32) -> (i32, i32) {
    %c0_i32 = arith.constant 0 : i32
    %c0_i32_0 = arith.constant 0 : i32
    %c0_i32_1 = arith.constant 0 : i32
    return %c0_i32, %c0_i32_0 : i32, i32
  }
  func.func @transform_3(%arg0: i32) -> (i32, i32) {
    %c0_i32 = arith.constant 0 : i32
    %c0_i32_0 = arith.constant 0 : i32
    %c0_i32_1 = arith.constant 0 : i32
    return %c0_i32, %c0_i32_0 : i32, i32
  }
  func.func @transform_4(%arg0: i32) -> (i32, i32) {
    %c0_i32 = arith.constant 0 : i32
    %c0_i32_0 = arith.constant 0 : i32
    %c0_i32_1 = arith.constant 0 : i32
    return %c0_i32, %c0_i32_0 : i32, i32
  }
  func.func @transform_5(%arg0: i32) -> (i32, i32, i32) {
    %c0_i32 = arith.constant 0 : i32
    %c0_i32_0 = arith.constant 0 : i32
    %c0_i32_1 = arith.constant 0 : i32
    return %arg0, %c0_i32, %c0_i32_0 : i32, i32, i32
  }
}

module attributes {stable_mosaic.version = 11 : i64} {
  func.func @temporal_block_kernel(%arg0: i32, %arg1: memref<1x16x128xf32, #tpu.memory_space<vmem>>, %arg2: memref<384x256xf32, #tpu.memory_space<vmem>>, %arg3: memref<1x256xf32, #tpu.memory_space<vmem>>, %arg4: memref<384x128xf32, #tpu.memory_space<vmem>>, %arg5: memref<1x128xf32, #tpu.memory_space<vmem>>, %arg6: memref<1x16x128xf32, #tpu.memory_space<vmem>>) attributes {dimension_semantics = [#tpu.dimension_semantics<parallel>], iteration_bounds = array<i64: 2>, scalar_prefetch = 0 : i64, scratch_operands = 0 : i64, tpu.core_type = #tpu.core_type<tc>, window_params = [{transform_indices = @transform_0, window_bounds = array<i64: 1, 16, 128>}, {pipeline_mode = #tpu.pipeline_mode<synchronous>, transform_indices = @transform_1, window_bounds = array<i64: 384, 256>}, {pipeline_mode = #tpu.pipeline_mode<synchronous>, transform_indices = @transform_2, window_bounds = array<i64: 1, 256>}, {pipeline_mode = #tpu.pipeline_mode<synchronous>, transform_indices = @transform_3, window_bounds = array<i64: 384, 128>}, {pipeline_mode = #tpu.pipeline_mode<synchronous>, transform_indices = @transform_4, window_bounds = array<i64: 1, 128>}, {transform_indices = @transform_5, window_bounds = array<i64: 1, 16, 128>}]} {
    %c0 = arith.constant 0 : index
    %c0_0 = arith.constant 0 : index
    %c0_1 = arith.constant 0 : index
    %0 = vector.load %arg1[%c0, %c0_0, %c0_1] : memref<1x16x128xf32, #tpu.memory_space<vmem>>, vector<1x16x128xf32>
    %1 = vector.shape_cast %0 : vector<1x16x128xf32> to vector<16x128xf32>
    %2 = tpu.iota {dimensions = array<i32: 0>} : vector<16x1xi32>
    %c16_i32 = arith.constant 16 : i32
    %c0_i32 = arith.constant 0 : i32
    %3 = arith.cmpi eq, %c16_i32, %c0_i32 : i32
    %c1_i32 = arith.constant 1 : i32
    %4 = arith.select %3, %c1_i32, %c16_i32 : i32
    %5 = vector.broadcast %4 : i32 to vector<16x1xi32>
    %6 = arith.remsi %2, %5 : vector<16x1xi32>
    %c0_i32_2 = arith.constant 0 : i32
    %7 = vector.broadcast %c0_i32_2 : i32 to vector<16x1xi32>
    %8 = arith.cmpi ne, %6, %7 : vector<16x1xi32>
    %c0_i32_3 = arith.constant 0 : i32
    %9 = vector.broadcast %c0_i32_3 : i32 to vector<16x1xi32>
    %10 = arith.cmpi slt, %6, %9 : vector<16x1xi32>
    %c0_i32_4 = arith.constant 0 : i32
    %11 = arith.cmpi slt, %4, %c0_i32_4 : i32
    %12 = vector.broadcast %11 : i1 to vector<16x1xi1>
    %13 = vector.broadcast %12 : vector<16x1xi1> to vector<16x1xi1>
    %14 = arith.xori %10, %13 : vector<16x1xi1>
    %15 = arith.andi %14, %8 : vector<16x1xi1>
    %16 = vector.broadcast %4 : i32 to vector<16x1xi32>
    %17 = arith.addi %6, %16 : vector<16x1xi32>
    %18 = arith.select %15, %17, %6 : vector<16x1xi1>, vector<16x1xi32>
    %c2_i32 = arith.constant 2 : i32
    %19 = tpu.dynamic_rotate %1 by %c2_i32 dim 0 : vector<16x128xf32>, i32 -> vector<16x128xf32>
    %c2_i32_5 = arith.constant 2 : i32
    %20 = vector.broadcast %c2_i32_5 : i32 to vector<16x1xi32>
    %21 = arith.cmpi sge, %18, %20 : vector<16x1xi32>
    %cst = arith.constant 0.000000e+00 : f32
    %22 = vector.broadcast %cst : f32 to vector<16x128xf32>
    %23 = vector.shape_cast %21 : vector<16x1xi1> to vector<16x1xi1>
    %24 = vector.broadcast %23 : vector<16x1xi1> to vector<16x128xi1>
    %25 = arith.select %24, %19, %22 : vector<16x128xi1>, vector<16x128xf32>
    %c1_i32_6 = arith.constant 1 : i32
    %26 = tpu.dynamic_rotate %1 by %c1_i32_6 dim 0 : vector<16x128xf32>, i32 -> vector<16x128xf32>
    %c1_i32_7 = arith.constant 1 : i32
    %27 = vector.broadcast %c1_i32_7 : i32 to vector<16x1xi32>
    %28 = arith.cmpi sge, %18, %27 : vector<16x1xi32>
    %cst_8 = arith.constant 0.000000e+00 : f32
    %29 = vector.broadcast %cst_8 : f32 to vector<16x128xf32>
    %30 = vector.shape_cast %28 : vector<16x1xi1> to vector<16x1xi1>
    %31 = vector.broadcast %30 : vector<16x1xi1> to vector<16x128xi1>
    %32 = arith.select %31, %26, %29 : vector<16x128xi1>, vector<16x128xf32>
    %33 = tpu.concatenate %25, %32, %1 in 1 : vector<16x128xf32>, vector<16x128xf32>, vector<16x128xf32> -> vector<16x384xf32>
    %c0_9 = arith.constant 0 : index
    %c0_10 = arith.constant 0 : index
    %34 = vector.load %arg2[%c0_9, %c0_10] : memref<384x256xf32, #tpu.memory_space<vmem>>, vector<384x256xf32>
    %cst_11 = arith.constant dense<0.000000e+00> : vector<16x256xf32>
    %35 = tpu.matmul %33, %34, %cst_11 {dimension_numbers = #tpu.dot_dimension_numbers<[1], [0], [0], [1], [0, 0, 1, 1], [], []>} : vector<16x384xf32>, vector<384x256xf32>, vector<16x256xf32> -> vector<16x256xf32>
    %c0_12 = arith.constant 0 : index
    %c0_13 = arith.constant 0 : index
    %36 = vector.load %arg3[%c0_12, %c0_13] : memref<1x256xf32, #tpu.memory_space<vmem>>, vector<1x256xf32>
    %37 = vector.broadcast %36 : vector<1x256xf32> to vector<16x256xf32>
    %38 = arith.addf %35, %37 : vector<16x256xf32>
    %39 = vector.extract_strided_slice %38 {offsets = [0, 0], sizes = [16, 128], strides = [1, 1]} : vector<16x256xf32> to vector<16x128xf32>
    %cst_14 = arith.constant 0.000000e+00 : f32
    %40 = vector.broadcast %cst_14 : f32 to vector<16x128xf32>
    %41 = arith.maximumf %39, %40 : vector<16x128xf32>
    %42 = vector.extract_strided_slice %38 {offsets = [0, 128], sizes = [16, 128], strides = [1, 1]} : vector<16x256xf32> to vector<16x128xf32>
    %c4_i32 = arith.constant 4 : i32
    %43 = tpu.dynamic_rotate %41 by %c4_i32 dim 0 : vector<16x128xf32>, i32 -> vector<16x128xf32>
    %c4_i32_15 = arith.constant 4 : i32
    %44 = vector.broadcast %c4_i32_15 : i32 to vector<16x1xi32>
    %45 = arith.cmpi sge, %18, %44 : vector<16x1xi32>
    %cst_16 = arith.constant 0.000000e+00 : f32
    %46 = vector.broadcast %cst_16 : f32 to vector<16x128xf32>
    %47 = vector.shape_cast %45 : vector<16x1xi1> to vector<16x1xi1>
    %48 = vector.broadcast %47 : vector<16x1xi1> to vector<16x128xi1>
    %49 = arith.select %48, %43, %46 : vector<16x128xi1>, vector<16x128xf32>
    %c2_i32_17 = arith.constant 2 : i32
    %50 = tpu.dynamic_rotate %41 by %c2_i32_17 dim 0 : vector<16x128xf32>, i32 -> vector<16x128xf32>
    %c2_i32_18 = arith.constant 2 : i32
    %51 = vector.broadcast %c2_i32_18 : i32 to vector<16x1xi32>
    %52 = arith.cmpi sge, %18, %51 : vector<16x1xi32>
    %cst_19 = arith.constant 0.000000e+00 : f32
    %53 = vector.broadcast %cst_19 : f32 to vector<16x128xf32>
    %54 = vector.shape_cast %52 : vector<16x1xi1> to vector<16x1xi1>
    %55 = vector.broadcast %54 : vector<16x1xi1> to vector<16x128xi1>
    %56 = arith.select %55, %50, %53 : vector<16x128xi1>, vector<16x128xf32>
    %57 = tpu.concatenate %49, %56, %41 in 1 : vector<16x128xf32>, vector<16x128xf32>, vector<16x128xf32> -> vector<16x384xf32>
    %c0_20 = arith.constant 0 : index
    %c0_21 = arith.constant 0 : index
    %58 = vector.load %arg4[%c0_20, %c0_21] : memref<384x128xf32, #tpu.memory_space<vmem>>, vector<384x128xf32>
    %cst_22 = arith.constant dense<0.000000e+00> : vector<16x128xf32>
    %59 = tpu.matmul %57, %58, %cst_22 {dimension_numbers = #tpu.dot_dimension_numbers<[1], [0], [0], [1], [0, 0, 1, 1], [], []>} : vector<16x384xf32>, vector<384x128xf32>, vector<16x128xf32> -> vector<16x128xf32>
    %c0_23 = arith.constant 0 : index
    %c0_24 = arith.constant 0 : index
    %60 = vector.load %arg5[%c0_23, %c0_24] : memref<1x128xf32, #tpu.memory_space<vmem>>, vector<1x128xf32>
    %61 = vector.broadcast %60 : vector<1x128xf32> to vector<16x128xf32>
    %62 = arith.addf %59, %61 : vector<16x128xf32>
    %cst_25 = arith.constant 0.000000e+00 : f32
    %63 = vector.broadcast %cst_25 : f32 to vector<16x128xf32>
    %64 = arith.maximumf %62, %63 : vector<16x128xf32>
    %65 = arith.addf %64, %42 : vector<16x128xf32>
    %cst_26 = arith.constant 0.000000e+00 : f32
    %66 = vector.broadcast %cst_26 : f32 to vector<16x128xf32>
    %67 = arith.maximumf %65, %66 : vector<16x128xf32>
    %68 = vector.shape_cast %67 : vector<16x128xf32> to vector<1x16x128xf32>
    %c0_27 = arith.constant 0 : index
    %c0_28 = arith.constant 0 : index
    %c0_29 = arith.constant 0 : index
    %69 = vector.load %arg6[%c0_27, %c0_28, %c0_29] : memref<1x16x128xf32, #tpu.memory_space<vmem>>, vector<1x16x128xf32>
    tpu.vector_store %arg6[%c0_27, %c0_28, %c0_29], %68 {strides = array<i32>} : memref<1x16x128xf32, #tpu.memory_space<vmem>>, vector<1x16x128xf32>,
    return
  }
  func.func @transform_0(%arg0: i32) -> (i32, i32, i32) {
    %c0_i32 = arith.constant 0 : i32
    %c0_i32_0 = arith.constant 0 : i32
    %c0_i32_1 = arith.constant 0 : i32
    return %arg0, %c0_i32, %c0_i32_0 : i32, i32, i32
  }
  func.func @transform_1(%arg0: i32) -> (i32, i32) {
    %c0_i32 = arith.constant 0 : i32
    %c0_i32_0 = arith.constant 0 : i32
    %c0_i32_1 = arith.constant 0 : i32
    return %c0_i32, %c0_i32_0 : i32, i32
  }
  func.func @transform_2(%arg0: i32) -> (i32, i32) {
    %c0_i32 = arith.constant 0 : i32
    %c0_i32_0 = arith.constant 0 : i32
    %c0_i32_1 = arith.constant 0 : i32
    return %c0_i32, %c0_i32_0 : i32, i32
  }
  func.func @transform_3(%arg0: i32) -> (i32, i32) {
    %c0_i32 = arith.constant 0 : i32
    %c0_i32_0 = arith.constant 0 : i32
    %c0_i32_1 = arith.constant 0 : i32
    return %c0_i32, %c0_i32_0 : i32, i32
  }
  func.func @transform_4(%arg0: i32) -> (i32, i32) {
    %c0_i32 = arith.constant 0 : i32
    %c0_i32_0 = arith.constant 0 : i32
    %c0_i32_1 = arith.constant 0 : i32
    return %c0_i32, %c0_i32_0 : i32, i32
  }
  func.func @transform_5(%arg0: i32) -> (i32, i32, i32) {
    %c0_i32 = arith.constant 0 : i32
    %c0_i32_0 = arith.constant 0 : i32
    %c0_i32_1 = arith.constant 0 : i32
    return %arg0, %c0_i32, %c0_i32_0 : i32, i32, i32
  }
}

</mosaic_0001>

<llo_original>
// kernel: tpu_custom_call.1
$region0: #{tpu_custom_call.1}
  #allocation0 [shape = 'u32[]', space=smem, size = 0x4, offset = 0x4, fixed_abs, tag = 'smem constant byte address 0x4 - core index']
  #allocation1 [shape = 'u32[72,128]{1,0:T(1,128)}', space=vmem, size = 0x9000, scoped, tag = 'internal scratch']
  %s0 = inlined_call_operand.hbm [shape: f32[2,16,128], index: 0, kind: input, shape index: {}]
  %s1 = inlined_call_operand.hbm [shape: f32[384,256], index: 1, kind: input, shape index: {}]
  %s2 = inlined_call_operand.hbm [shape: f32[1,256], index: 2, kind: input, shape index: {}]
  %s3 = inlined_call_operand.hbm [shape: f32[384,128], index: 3, kind: input, shape index: {}]
  %s4 = inlined_call_operand.vmem [shape: f32[1,128], index: 4, kind: input, shape index: {}]
  %s5 = inlined_call_operand.hbm [shape: f32[2,16,128], index: 5, kind: output, shape index: {}]
  %s6 = sld [smem:[#allocation0]]
  $region69: #{tpu_custom_call.1} parent=0
    _
  %s8 = ssub.s32 1, %s6
  %s9 = scalar_select 0, %s8, %s6
  $region1: #{tpu_custom_call.1} parent=0
    #allocation2 [shape = 'u8[16384]{0}', space=vmem, size = 0x4000, scoped, tag = 'input window, operand 0']
    #allocation3 [shape = 's32[2]{0}', space=sflag, size = 0x8, scoped, tag = 'scoped memory for tpu_custom_call.1']
    #allocation4 [shape = 's32[2]{0}', space=sflag, size = 0x8, scoped, tag = 'scoped memory for tpu_custom_call.1']
    #allocation5 [shape = 'u8[393216]{0}', space=vmem, size = 0x60000, scoped, tag = 'input window, operand 1, single buffered']
    #allocation6 [shape = 's32[1]{0}', space=sflag, size = 0x4, scoped, tag = 'scoped memory for tpu_custom_call.1']
    #allocation7 [shape = 'u8[1024]{0}', space=vmem, size = 0x400, scoped, tag = 'input window, operand 2, single buffered']
    #allocation8 [shape = 'u8[196608]{0}', space=vmem, size = 0x30000, scoped, tag = 'input window, operand 3, single buffered']
    #allocation9 [shape = 's32[1]{0}', space=sflag, size = 0x4, scoped, tag = 'scoped memory for tpu_custom_call.1']
    #allocation10 [shape = 'u8[16384]{0}', space=vmem, size = 0x4000, scoped, tag = 'output window, operand 0']
    %10 = vsyncpa [#allocation3], 0
    %s11 = scalar_lea.sflag [#allocation3], 1
    %12 = vsyncpa %s11, 0
    %13 = vsyncpa [#allocation6], 0
    %14 = vsyncpa [#allocation9], 0
    %15 = vsyncpa [#allocation4], 0
    %s16 = scalar_lea.sflag [#allocation4], 1
    %17 = vsyncpa %s16, 0
    loop: start=0, step=1, limit=4
    $region2: #{tpu_custom_call.1} parent=1 // loop_pre_header
      _
    $region3: #{tpu_custom_call.1} parent=1 // loop_header
      %s19 = sphi 0, %s23
      %p20 = scmp.ge.s32.totalorder %s19, 4
      %s29 = sphi 0, %s31
      %s32 = sphi 0, %s29
      %s33 = sphi 0, %s32
      %s49 = sphi 0, %s33
      %s53 = sphi 0, %s53
      %s55 = sphi 0, %s53
      %s56 = sphi 0, %s55
      %s70 = sphi 0, %s56
      %s74 = sphi 0, %s74
      %s76 = sphi 0, %s74
      %s77 = sphi 0, %s76
      %s91 = sphi 0, %s77
      %s95 = sphi 0, %s95
      %s97 = sphi 0, %s95
      %s98 = sphi 0, %s97
      %s112 = sphi 0, %s98
      %s116 = sphi 0, %s116
      %s118 = sphi 0, %s116
      %s119 = sphi 0, %s118
      %s133 = sphi 0, %s119
      %s139 = sphi 0, %s141
      %s142 = sphi 0, %s139
      %s143 = sphi 0, %s142
      %s159 = sphi 0, %s143
    $region4: #{tpu_custom_call.1} parent=1 // loop_header_branch
      %22 = sbr.rel (%p20) target = $region8
    $region5: #{tpu_custom_call.1} parent=1 // loop_body
      %s24 = ssub.s32 %s19, 1
      %s25 = ssub.s32 %s19, 2
      %s26 = sadd.s32 %s19, 1
      %s27 = ssub.s32 %s19, %s26
      %p28 = scmp.eq.s32.totalorder %s27, 0
      %s30 = sadd.s32 %s29, 1
      %s31 = scalar_select %p28, %s29, %s30
      %p34 = pneg %p28
      %p35 = scmp.eq.s32.totalorder %s19, 1
      %p36 = por %p34, %p35
      %p37 = scmp.ne.s32.totalorder %s29, %s32
      %p38 = scmp.eq.s32.totalorder %s19, 0
      %p39 = por %p37, %p38
      %p40 = scmp.ne.s32.totalorder %s29, %s32
      %p41 = scmp.eq.s32.totalorder %s24, 1
      %p42 = por %p40, %p41
      %p43 = scmp.ne.s32.totalorder %s32, %s33
      %p44 = scmp.eq.s32.totalorder %s24, 0
      %p45 = por %p43, %p44
      %p46 = scmp.ne.s32.totalorder %s32, %s33
      %p47 = scmp.eq.s32.totalorder %s25, 1
      %p48 = por %p46, %p47
      %p50 = scmp.ne.s32.totalorder %s33, %s49
      %p51 = scmp.eq.s32.totalorder %s25, 0
      %p52 = por %p50, %p51
      %s54 = sadd.s32 %s53, 1
      %p57 = scmp.eq.s32.totalorder %s19, 1
      %p58 = scmp.ne.s32.totalorder %s53, %s55
      %p59 = scmp.eq.s32.totalorder %s19, 0
      %p60 = por %p58, %p59
      %p61 = scmp.ne.s32.totalorder %s53, %s55
      %p62 = scmp.eq.s32.totalorder %s24, 1
      %p63 = por %p61, %p62
      %p64 = scmp.ne.s32.totalorder %s55, %s56
      %p65 = scmp.eq.s32.totalorder %s24, 0
      %p66 = por %p64, %p65
      %p67 = scmp.ne.s32.totalorder %s55, %s56
      %p68 = scmp.eq.s32.totalorder %s25, 1
      %p69 = por %p67, %p68
      %p71 = scmp.ne.s32.totalorder %s56, %s70
      %p72 = scmp.eq.s32.totalorder %s25, 0
      %p73 = por %p71, %p72
      %s75 = sadd.s32 %s74, 1
      %p78 = scmp.eq.s32.totalorder %s19, 1
      %p79 = scmp.ne.s32.totalorder %s74, %s76
      %p80 = scmp.eq.s32.totalorder %s19, 0
      %p81 = por %p79, %p80
      %p82 = scmp.ne.s32.totalorder %s74, %s76
      %p83 = scmp.eq.s32.totalorder %s24, 1
      %p84 = por %p82, %p83
      %p85 = scmp.ne.s32.totalorder %s76, %s77
      %p86 = scmp.eq.s32.totalorder %s24, 0
      %p87 = por %p85, %p86
      %p88 = scmp.ne.s32.totalorder %s76, %s77
      %p89 = scmp.eq.s32.totalorder %s25, 1
      %p90 = por %p88, %p89
      %p92 = scmp.ne.s32.totalorder %s77, %s91
      %p93 = scmp.eq.s32.totalorder %s25, 0
      %p94 = por %p92, %p93
      %s96 = sadd.s32 %s95, 1
      %p99 = scmp.eq.s32.totalorder %s19, 1
      %p100 = scmp.ne.s32.totalorder %s95, %s97
      %p101 = scmp.eq.s32.totalorder %s19, 0
      %p102 = por %p100, %p101
      %p103 = scmp.ne.s32.totalorder %s95, %s97
      %p104 = scmp.eq.s32.totalorder %s24, 1
      %p105 = por %p103, %p104
      %p106 = scmp.ne.s32.totalorder %s97, %s98
      %p107 = scmp.eq.s32.totalorder %s24, 0
      %p108 = por %p106, %p107
      %p109 = scmp.ne.s32.totalorder %s97, %s98
      %p110 = scmp.eq.s32.totalorder %s25, 1
      %p111 = por %p109, %p110
      %p113 = scmp.ne.s32.totalorder %s98, %s112
      %p114 = scmp.eq.s32.totalorder %s25, 0
      %p115 = por %p113, %p114
      %s117 = sadd.s32 %s116, 1
      %p120 = scmp.eq.s32.totalorder %s19, 1
      %p121 = scmp.ne.s32.totalorder %s116, %s118
      %p122 = scmp.eq.s32.totalorder %s19, 0
      %p123 = por %p121, %p122
      %p124 = scmp.ne.s32.totalorder %s116, %s118
      %p125 = scmp.eq.s32.totalorder %s24, 1
      %p126 = por %p124, %p125
      %p127 = scmp.ne.s32.totalorder %s118, %s119
      %p128 = scmp.eq.s32.totalorder %s24, 0
      %p129 = por %p127, %p128
      %p130 = scmp.ne.s32.totalorder %s118, %s119
      %p131 = scmp.eq.s32.totalorder %s25, 1
      %p132 = por %p130, %p131
      %p134 = scmp.ne.s32.totalorder %s119, %s133
      %p135 = scmp.eq.s32.totalorder %s25, 0
      %p136 = por %p134, %p135
      %s137 = ssub.s32 %s19, %s26
      %p138 = scmp.eq.s32.totalorder %s137, 0
      %s140 = sadd.s32 %s139, 1
      %s141 = scalar_select %p138, %s139, %s140
      %p144 = pneg %p138
      %p145 = scmp.eq.s32.totalorder %s19, 1
      %p146 = por %p144, %p145
      %p147 = scmp.ne.s32.totalorder %s139, %s142
      %p148 = scmp.eq.s32.totalorder %s19, 0
      %p149 = por %p147, %p148
      %p150 = scmp.ne.s32.totalorder %s139, %s142
      %p151 = scmp.eq.s32.totalorder %s24, 1
      %p152 = por %p150, %p151
      %p153 = scmp.ne.s32.totalorder %s142, %s143
      %p154 = scmp.eq.s32.totalorder %s24, 0
      %p155 = por %p153, %p154
      %p156 = scmp.ne.s32.totalorder %s142, %s143
      %p157 = scmp.eq.s32.totalorder %s25, 1
      %p158 = por %p156, %p157
      %p160 = scmp.ne.s32.totalorder %s143, %s159
      %p161 = scmp.eq.s32.totalorder %s25, 0
      %p162 = por %p160, %p161
      %p163 = scmp.le.s32.totalorder 1, %s19
      %p164 = scmp.lt.s32.totalorder %s19, 3
      %p165 = pnand %p163, %p164
      %p166 = pneg %p165
      // Predicated region
      $region9: #{tpu_custom_call.1} parent=5 // pred_check
        _
      $region10: #{tpu_custom_call.1} parent=5 // pred_check_branch
        %168 = sbr.rel (%p165) target = $region12
      $region11: #{tpu_custom_call.1} parent=5 // pred_region
        %s169 = ssub.s32 %s19, 1
        // Predicated region
        $region13: #{tpu_custom_call.1} parent=11 // pred_check
          %p170 = pneg %p66
        $region14: #{tpu_custom_call.1} parent=11 // pred_check_branch
          %172 = sbr.rel (%p170) target = $region16
        $region15: #{tpu_custom_call.1} parent=11 // pred_region
          %174 = vsyncadd [#allocation6], 0
          %s175 = sshll.u32 %s1, 4
          %s176 = int_to_ptr.hbm [resolvable:$true] %s175
          %s177 = sshll.u32 [#allocation5], 4
          %s178 = int_to_ptr.vmem [resolvable:$true] %s177
          %183 = dma.hbm_to_vmem [thread:$0]  %s176, 12288, %s178, [#allocation6], 256, 256, 16
        $region16: #{tpu_custom_call.1} parent=11 // pred_fallthru
          _
        // Predicated region
        $region17: #{tpu_custom_call.1} parent=11 // pred_check
          %p184 = pneg %p87
        $region18: #{tpu_custom_call.1} parent=11 // pred_check_branch
          %186 = sbr.rel (%p184) target = $region20
        $region19: #{tpu_custom_call.1} parent=11 // pred_region
          %188 = vsyncadd [#allocation6], 0
          %s190 = sshll.u32 %s2, 4
          %s191 = int_to_ptr.hbm [resolvable:$true] %s190
          %s192 = sshll.u32 [#allocation7], 4
          %s193 = int_to_ptr.vmem [resolvable:$true] %s192
          %195 = dma.hbm_to_vmem [thread:$0]  %s191, 32, %s193, [#allocation6]
        $region20: #{tpu_custom_call.1} parent=11 // pred_fallthru
          _
        // Predicated region
        $region21: #{tpu_custom_call.1} parent=11 // pred_check
          %p196 = pneg %p108
        $region22: #{tpu_custom_call.1} parent=11 // pred_check_branch
          %198 = sbr.rel (%p196) target = $region24
        $region23: #{tpu_custom_call.1} parent=11 // pred_region
          %200 = vsyncadd [#allocation9], 0
          %s201 = sshll.u32 %s3, 4
          %s202 = int_to_ptr.hbm [resolvable:$true] %s201
          %s203 = sshll.u32 [#allocation8], 4
          %s204 = int_to_ptr.vmem [resolvable:$true] %s203
          %209 = dma.hbm_to_vmem [thread:$0]  %s202, 6144, %s204, [#allocation9], 128, 128, 8
        $region24: #{tpu_custom_call.1} parent=11 // pred_fallthru
          _
        // Predicated region
        $region25: #{tpu_custom_call.1} parent=11 // pred_check
          %p210 = pneg %p129
        $region26: #{tpu_custom_call.1} parent=11 // pred_check_branch
          %212 = sbr.rel (%p210) target = $region28
        $region27: #{tpu_custom_call.1} parent=11 // pred_region
          _
        $region28: #{tpu_custom_call.1} parent=11 // pred_fallthru
          _
      $region12: #{tpu_custom_call.1} parent=5 // pred_fallthru
        _
      %p213 = scmp.lt.s32.totalorder %s19, 2
      // Predicated region
      $region29: #{tpu_custom_call.1} parent=5 // pred_check
        %p214 = pneg %p213
      $region30: #{tpu_custom_call.1} parent=5 // pred_check_branch
        %216 = sbr.rel (%p214) target = $region32
      $region31: #{tpu_custom_call.1} parent=5 // pred_region
        // Predicated region
        $region33: #{tpu_custom_call.1} parent=31 // pred_check
          %p217 = pneg %p39
        $region34: #{tpu_custom_call.1} parent=31 // pred_check_branch
          %219 = sbr.rel (%p217) target = $region36
        $region35: #{tpu_custom_call.1} parent=31 // pred_region
          %s220 = sand.u32 %s29, 1
          %s221 = scalar_lea.sflag [#allocation3], %s220
          %s222 = sand.u32 %s29, 1
          %s223 = smul.addr %s222, 16
          %s224 = scalar_lea.vmem [#allocation2], %s223
          %226 = vsyncadd %s221, 0
          %s227 = smul.addr %s19, 2
          %s228 = smul.addr %s227, 8
          %s229 = scalar_lea.hbm %s0, %s228
          %s230 = sshll.u32 %s229, 4
          %s231 = int_to_ptr.hbm [resolvable:$true] %s230
          %s232 = sshll.u32 %s224, 4
          %s233 = int_to_ptr.vmem [resolvable:$true] %s232
          %238 = dma.hbm_to_vmem [thread:$0]  %s231, 256, %s233, %s221, 128, 128, 8
        $region36: #{tpu_custom_call.1} parent=31 // pred_fallthru
          _
      $region32: #{tpu_custom_call.1} parent=5 // pred_fallthru
        _
      %p239 = scmp.le.s32.totalorder 1, %s19
      %p240 = scmp.lt.s32.totalorder %s19, 3
      %p241 = pnand %p239, %p240
      %p242 = pneg %p241
      // Predicated region
      $region37: #{tpu_custom_call.1} parent=5 // pred_check
        _
      $region38: #{tpu_custom_call.1} parent=5 // pred_check_branch
        %244 = sbr.rel (%p241) target = $region40
      $region39: #{tpu_custom_call.1} parent=5 // pred_region
        %s245 = ssub.s32 %s19, 1
        %s246 = sand.u32 %s32, 1
        %s247 = scalar_lea.sflag [#allocation3], %s246
        %s248 = sand.u32 %s32, 1
        %s249 = smul.addr %s248, 16
        %s250 = scalar_lea.vmem [#allocation2], %s249
        // Predicated region
        $region41: #{tpu_custom_call.1} parent=39 // pred_check
          %p251 = pneg %p45
        $region42: #{tpu_custom_call.1} parent=39 // pred_check_branch
          %253 = sbr.rel (%p251) target = $region44
        $region43: #{tpu_custom_call.1} parent=39 // pred_region
          %255 = dma.done %s247, 256
        $region44: #{tpu_custom_call.1} parent=39 // pred_fallthru
          _
        // Predicated region
        $region45: #{tpu_custom_call.1} parent=39 // pred_check
          %p256 = pneg %p66
        $region46: #{tpu_custom_call.1} parent=39 // pred_check_branch
          %258 = sbr.rel (%p256) target = $region48
        $region47: #{tpu_custom_call.1} parent=39 // pred_region
          %260 = dma.done [#allocation6], 12288
        $region48: #{tpu_custom_call.1} parent=39 // pred_fallthru
          _
        // Predicated region
        $region49: #{tpu_custom_call.1} parent=39 // pred_check
          %p261 = pneg %p87
        $region50: #{tpu_custom_call.1} parent=39 // pred_check_branch
          %263 = sbr.rel (%p261) target = $region52
        $region51: #{tpu_custom_call.1} parent=39 // pred_region
          %265 = dma.done [#allocation6], 32
        $region52: #{tpu_custom_call.1} parent=39 // pred_fallthru
          _
        // Predicated region
        $region53: #{tpu_custom_call.1} parent=39 // pred_check
          %p266 = pneg %p108
        $region54: #{tpu_custom_call.1} parent=39 // pred_check_branch
          %268 = sbr.rel (%p266) target = $region56
        $region55: #{tpu_custom_call.1} parent=39 // pred_region
          %270 = dma.done [#allocation9], 6144
        $region56: #{tpu_custom_call.1} parent=39 // pred_fallthru
          _
        %s271 = sand.u32 %s32, 1
        %s272 = scalar_lea.sflag [#allocation3], %s271
        %s273 = sand.u32 %s32, 1
        %s274 = smul.addr %s273, 16
        %s275 = scalar_lea.vmem [#allocation2], %s274
        %p276 = pneg %p45
        %p277 = pneg %p42
        %p278 = pneg %p66
        %p279 = pneg %p63
        %p280 = pneg %p87
        %p281 = pneg %p84
        %p282 = pneg %p108
        %p283 = pneg %p105
        %p284 = pneg %p129
        %p285 = pneg %p126
        %p286 = pneg %p155
        %p287 = pneg %p152
        %s288 = sand.u32 %s142, 1
        %s289 = scalar_lea.sflag [#allocation4], %s288
        %s290 = sand.u32 %s142, 1
        %s291 = smul.addr %s290, 16
        %s292 = scalar_lea.vmem [#allocation10], %s291
        %v293 = vld [vmem:[%s250] sm:$0xff]
        %v294 = vld [vmem:[%s250 + $0x8] sm:$0xff]
        %v295 = vlaneseq
        %v296 = vshrl.u32 %v295, 7
        %v297 = vadd.s32 %v296, 8
        %vm298 = vcmp.lt.s32.totalorder %v296, 0
        %v299 = vsub.s32 0, %v296
        %v300 = vsel %vm298, %v299, %v296
        %v301 = vshrl.u32 %v300, 4
        %v302 = vand.u32 %v300, 15
        %v303 = vsub.s32 0, %v302
        %v304 = vsel %vm298, %v303, %v302
        %vm305 = vcmp.lt.s32.totalorder %v297, 0
        %v306 = vsub.s32 0, %v297
        %v307 = vsel %vm305, %v306, %v297
        %v308 = vshrl.u32 %v307, 4
        %v309 = vand.u32 %v307, 15
        %v310 = vsub.s32 0, %v309
        %v311 = vsel %vm305, %v310, %v309
        %vm312 = vcmp.ne.s32.totalorder %v304, 0
        %vm313 = vcmp.ne.s32.totalorder %v311, 0
        %vm314 = vcmp.lt.s32.totalorder %v304, 0
        %vm315 = vcmp.lt.s32.totalorder %v311, 0
        %vm316 = vmand %vm314, %vm312
        %vm317 = vmand %vm315, %vm313
        %v318 = vadd.s32 %v304, 16
        %v319 = vadd.s32 %v311, 16
        %v320 = vsel %vm316, %v318, %v304
        %v321 = vsel %vm317, %v319, %v311
        %v322 = vrot.slane %v293, 6
        %v323 = vrot.slane %v294, 6
        %vm324 = vcmp.lt.s32.totalorder %v296, 2
        %v325 = vsel %vm324, %v322, %v323
        %v326 = vsel %vm324, %v323, %v322
        %vm327 = vcmp.ge.s32.totalorder %v320, 2
        %vm328 = vcmp.ge.s32.totalorder %v321, 2
        %v329 = vsel %vm327, 1, 0
        %v330 = vsel %vm328, 1, 0
        %vm331 = vcmp.eq.s32.totalorder %v329, 1
        %vm332 = vcmp.eq.s32.totalorder %v330, 1
        %v333 = vsel %vm331, %v326, 0.0
        %v334 = vsel %vm332, %v325, 0.0
        %v335 = vrot.slane %v293, 7
        %v336 = vrot.slane %v294, 7
        %vm337 = vcmp.lt.s32.totalorder %v296, 1
        %v338 = vsel %vm337, %v335, %v336
        %v339 = vsel %vm337, %v336, %v335
        %vm340 = vcmp.ge.s32.totalorder %v320, 1
        %vm341 = vcmp.ge.s32.totalorder %v321, 1
        %v342 = vsel %vm340, 1, 0
        %v343 = vsel %vm341, 1, 0
        %vm344 = vcmp.eq.s32.totalorder %v342, 1
        %vm345 = vcmp.eq.s32.totalorder %v343, 1
        %v346 = vsel %vm344, %v339, 0.0
        %v347 = vsel %vm345, %v338, 0.0
        %v348 = vld [vmem:[#allocation5] sm:$0xff]
        %v349 = vld [vmem:[#allocation5 + $0x8] sm:$0xff]
        %v350 = vld [vmem:[#allocation5 + $0x10] sm:$0xff]
        %v351 = vld [vmem:[#allocation5 + $0x18] sm:$0xff]
        %v352 = vld [vmem:[#allocation5 + $0x20] sm:$0xff]
        %v353 = vld [vmem:[#allocation5 + $0x28] sm:$0xff]
        %v354 = vld [vmem:[#allocation5 + $0x30] sm:$0xff]
        %v355 = vld [vmem:[#allocation5 + $0x38] sm:$0xff]
        %v356 = vld [vmem:[#allocation5 + $0x40] sm:$0xff]
        %v357 = vld [vmem:[#allocation5 + $0x48] sm:$0xff]
        %v358 = vld [vmem:[#allocation5 + $0x50] sm:$0xff]
        %v359 = vld [vmem:[#allocation5 + $0x58] sm:$0xff]
        %v360 = vld [vmem:[#allocation5 + $0x60] sm:$0xff]
        %v361 = vld [vmem:[#allocation5 + $0x68] sm:$0xff]
        %v362 = vld [vmem:[#allocation5 + $0x70] sm:$0xff]
        %v363 = vld [vmem:[#allocation5 + $0x78] sm:$0xff]
        %v364 = vld [vmem:[#allocation5 + $0x80] sm:$0xff]
        %v365 = vld [vmem:[#allocation5 + $0x88] sm:$0xff]
        %v366 = vld [vmem:[#allocation5 + $0x90] sm:$0xff]
        %v367 = vld [vmem:[#allocation5 + $0x98] sm:$0xff]
        %v368 = vld [vmem:[#allocation5 + $0xa0] sm:$0xff]
        %v369 = vld [vmem:[#allocation5 + $0xa8] sm:$0xff]
        %v370 = vld [vmem:[#allocation5 + $0xb0] sm:$0xff]
        %v371 = vld [vmem:[#allocation5 + $0xb8] sm:$0xff]
        %v372 = vld [vmem:[#allocation5 + $0xc0] sm:$0xff]
        %v373 = vld [vmem:[#allocation5 + $0xc8] sm:$0xff]
        %v374 = vld [vmem:[#allocation5 + $0xd0] sm:$0xff]
        %v375 = vld [vmem:[#allocation5 + $0xd8] sm:$0xff]
        %v376 = vld [vmem:[#allocation5 + $0xe0] sm:$0xff]
        %v377 = vld [vmem:[#allocation5 + $0xe8] sm:$0xff]
        %v378 = vld [vmem:[#allocation5 + $0xf0] sm:$0xff]
        %v379 = vld [vmem:[#allocation5 + $0xf8] sm:$0xff]
        %v380 = vld [vmem:[#allocation5 + $0x100] sm:$0xff]
        %v381 = vld [vmem:[#allocation5 + $0x108] sm:$0xff]
        %v382 = vld [vmem:[#allocation5 + $0x110] sm:$0xff]
        %v383 = vld [vmem:[#allocation5 + $0x118] sm:$0xff]
        %v384 = vld [vmem:[#allocation5 + $0x120] sm:$0xff]
        %v385 = vld [vmem:[#allocation5 + $0x128] sm:$0xff]
        %v386 = vld [vmem:[#allocation5 + $0x130] sm:$0xff]
        %v387 = vld [vmem:[#allocation5 + $0x138] sm:$0xff]
        %v388 = vld [vmem:[#allocation5 + $0x140] sm:$0xff]
        %v389 = vld [vmem:[#allocation5 + $0x148] sm:$0xff]
        %v390 = vld [vmem:[#allocation5 + $0x150] sm:$0xff]
        %v391 = vld [vmem:[#allocation5 + $0x158] sm:$0xff]
        %v392 = vld [vmem:[#allocation5 + $0x160] sm:$0xff]
        %v393 = vld [vmem:[#allocation5 + $0x168] sm:$0xff]
        %v394 = vld [vmem:[#allocation5 + $0x170] sm:$0xff]
        %v395 = vld [vmem:[#allocation5 + $0x178] sm:$0xff]
        %v396 = vld [vmem:[#allocation5 + $0x180] sm:$0xff]
        %v397 = vld [vmem:[#allocation5 + $0x188] sm:$0xff]
        %v398 = vld [vmem:[#allocation5 + $0x190] sm:$0xff]
        %v399 = vld [vmem:[#allocation5 + $0x198] sm:$0xff]
        %v400 = vld [vmem:[#allocation5 + $0x1a0] sm:$0xff]
        %v401 = vld [vmem:[#allocation5 + $0x1a8] sm:$0xff]
        %v402 = vld [vmem:[#allocation5 + $0x1b0] sm:$0xff]
        %v403 = vld [vmem:[#allocation5 + $0x1b8] sm:$0xff]
        %v404 = vld [vmem:[#allocation5 + $0x1c0] sm:$0xff]
        %v405 = vld [vmem:[#allocation5 + $0x1c8] sm:$0xff]
        %v406 = vld [vmem:[#allocation5 + $0x1d0] sm:$0xff]
        %v407 = vld [vmem:[#allocation5 + $0x1d8] sm:$0xff]
        %v408 = vld [vmem:[#allocation5 + $0x1e0] sm:$0xff]
        %v409 = vld [vmem:[#allocation5 + $0x1e8] sm:$0xff]
        %v410 = vld [vmem:[#allocation5 + $0x1f0] sm:$0xff]
        %v411 = vld [vmem:[#allocation5 + $0x1f8] sm:$0xff]
        %v412 = vld [vmem:[#allocation5 + $0x200] sm:$0xff]
        %v413 = vld [vmem:[#allocation5 + $0x208] sm:$0xff]
        %v414 = vld [vmem:[#allocation5 + $0x210] sm:$0xff]
        %v415 = vld [vmem:[#allocation5 + $0x218] sm:$0xff]
        %v416 = vld [vmem:[#allocation5 + $0x220] sm:$0xff]
        %v417 = vld [vmem:[#allocation5 + $0x228] sm:$0xff]
        %v418 = vld [vmem:[#allocation5 + $0x230] sm:$0xff]
        %v419 = vld [vmem:[#allocation5 + $0x238] sm:$0xff]
        %v420 = vld [vmem:[#allocation5 + $0x240] sm:$0xff]
        %v421 = vld [vmem:[#allocation5 + $0x248] sm:$0xff]
        %v422 = vld [vmem:[#allocation5 + $0x250] sm:$0xff]
        %v423 = vld [vmem:[#allocation5 + $0x258] sm:$0xff]
        %v424 = vld [vmem:[#allocation5 + $0x260] sm:$0xff]
        %v425 = vld [vmem:[#allocation5 + $0x268] sm:$0xff]
        %v426 = vld [vmem:[#allocation5 + $0x270] sm:$0xff]
        %v427 = vld [vmem:[#allocation5 + $0x278] sm:$0xff]
        %v428 = vld [vmem:[#allocation5 + $0x280] sm:$0xff]
        %v429 = vld [vmem:[#allocation5 + $0x288] sm:$0xff]
        %v430 = vld [vmem:[#allocation5 + $0x290] sm:$0xff]
        %v431 = vld [vmem:[#allocation5 + $0x298] sm:$0xff]
        %v432 = vld [vmem:[#allocation5 + $0x2a0] sm:$0xff]
        %v433 = vld [vmem:[#allocation5 + $0x2a8] sm:$0xff]
        %v434 = vld [vmem:[#allocation5 + $0x2b0] sm:$0xff]
        %v435 = vld [vmem:[#allocation5 + $0x2b8] sm:$0xff]
        %v436 = vld [vmem:[#allocation5 + $0x2c0] sm:$0xff]
        %v437 = vld [vmem:[#allocation5 + $0x2c8] sm:$0xff]
        %v438 = vld [vmem:[#allocation5 + $0x2d0] sm:$0xff]
        %v439 = vld [vmem:[#allocation5 + $0x2d8] sm:$0xff]
        %v440 = vld [vmem:[#allocation5 + $0x2e0] sm:$0xff]
        %v441 = vld [vmem:[#allocation5 + $0x2e8] sm:$0xff]
        %v442 = vld [vmem:[#allocation5 + $0x2f0] sm:$0xff]
        %v443 = vld [vmem:[#allocation5 + $0x2f8] sm:$0xff]
        %v444 = vld [vmem:[#allocation7] sm:$0x3]
        %v446 = vperm.slane %v444, 0
        %v447 = vperm.slane %v444, 1
        %450 = vmatpush.msra.mxu0 %v378
        %451 = vmatpush.msra.mxu0 %v376
        %452 = vmatpush.msra.mxu0 %v374
        %453 = vmatpush.msra.mxu0 %v372
        %454 = vmatpush.msra.mxu0 %v370
        %455 = vmatpush.msra.mxu0 %v368
        %456 = vmatpush.msra.mxu0 %v366
        %457 = vmatpush.msra.mxu0 %v364
        %458 = vmatpush.msra.mxu0 %v362
        %459 = vmatpush.msra.mxu0 %v360
        %460 = vmatpush.msra.mxu0 %v358
        %461 = vmatpush.msra.mxu0 %v356
        %462 = vmatpush.msra.mxu0 %v354
        %463 = vmatpush.msra.mxu0 %v352
        %464 = vmatpush.msra.mxu0 %v350
        %465 = vmatpush.msra.mxu0 %v348
        %466 = vmatmul.f32.gmra.mxu0 %v333
        %v467 = vpop.f32.mrf.mxu0
        %v468 = vadd.f32 %v446, %v467
        %469 = vmatmul.f32.gmra.mxu0 %v334
        %v470 = vpop.f32.mrf.mxu0
        %v471 = vadd.f32 %v446, %v470
        %472 = vdwg.mxu0
        %473 = vmatpush.msra.mxu0 %v410
        %474 = vmatpush.msra.mxu0 %v408
        %475 = vmatpush.msra.mxu0 %v406
        %476 = vmatpush.msra.mxu0 %v404
        %477 = vmatpush.msra.mxu0 %v402
        %478 = vmatpush.msra.mxu0 %v400
        %479 = vmatpush.msra.mxu0 %v398
        %480 = vmatpush.msra.mxu0 %v396
        %481 = vmatpush.msra.mxu0 %v394
        %482 = vmatpush.msra.mxu0 %v392
        %483 = vmatpush.msra.mxu0 %v390
        %484 = vmatpush.msra.mxu0 %v388
        %485 = vmatpush.msra.mxu0 %v386
        %486 = vmatpush.msra.mxu0 %v384
        %487 = vmatpush.msra.mxu0 %v382
        %488 = vmatpush.msra.mxu0 %v380
        %489 = vmatmul.f32.gmra.mxu0 %v346
        %v490 = vpop.f32.mrf.mxu0
        %v491 = vadd.f32 %v468, %v490
        %492 = vmatmul.f32.gmra.mxu0 %v347
        %v493 = vpop.f32.mrf.mxu0
        %v494 = vadd.f32 %v471, %v493
        %495 = vdwg.mxu0
        %496 = vmatpush.msra.mxu0 %v442
        %497 = vmatpush.msra.mxu0 %v440
        %498 = vmatpush.msra.mxu0 %v438
        %499 = vmatpush.msra.mxu0 %v436
        %500 = vmatpush.msra.mxu0 %v434
        %501 = vmatpush.msra.mxu0 %v432
        %502 = vmatpush.msra.mxu0 %v430
        %503 = vmatpush.msra.mxu0 %v428
        %504 = vmatpush.msra.mxu0 %v426
        %505 = vmatpush.msra.mxu0 %v424
        %506 = vmatpush.msra.mxu0 %v422
        %507 = vmatpush.msra.mxu0 %v420
        %508 = vmatpush.msra.mxu0 %v418
        %509 = vmatpush.msra.mxu0 %v416
        %510 = vmatpush.msra.mxu0 %v414
        %511 = vmatpush.msra.mxu0 %v412
        %512 = vmatmul.f32.gmra.mxu0 %v293
        %v513 = vpop.f32.mrf.mxu0
        %v514 = vadd.f32 %v491, %v513
        %515 = vmatmul.f32.gmra.mxu0 %v294
        %v516 = vpop.f32.mrf.mxu0
        %v517 = vadd.f32 %v494, %v516
        %518 = vdwg.mxu0
        %519 = vmatpush.msra.mxu0 %v379
        %520 = vmatpush.msra.mxu0 %v377
        %521 = vmatpush.msra.mxu0 %v375
        %522 = vmatpush.msra.mxu0 %v373
        %523 = vmatpush.msra.mxu0 %v371
        %524 = vmatpush.msra.mxu0 %v369
        %525 = vmatpush.msra.mxu0 %v367
        %526 = vmatpush.msra.mxu0 %v365
        %527 = vmatpush.msra.mxu0 %v363
        %528 = vmatpush.msra.mxu0 %v361
        %529 = vmatpush.msra.mxu0 %v359
        %530 = vmatpush.msra.mxu0 %v357
        %531 = vmatpush.msra.mxu0 %v355
        %532 = vmatpush.msra.mxu0 %v353
        %533 = vmatpush.msra.mxu0 %v351
        %534 = vmatpush.msra.mxu0 %v349
        %535 = vmatmul.f32.gmra.mxu0 %v333
        %v536 = vpop.f32.mrf.mxu0
        %v537 = vadd.f32 %v447, %v536
        %538 = vmatmul.f32.gmra.mxu0 %v334
        %v539 = vpop.f32.mrf.mxu0
        %v540 = vadd.f32 %v447, %v539
        %541 = vdwg.mxu0
        %542 = vmatpush.msra.mxu0 %v411
        %543 = vmatpush.msra.mxu0 %v409
        %544 = vmatpush.msra.mxu0 %v407
        %545 = vmatpush.msra.mxu0 %v405
        %546 = vmatpush.msra.mxu0 %v403
        %547 = vmatpush.msra.mxu0 %v401
        %548 = vmatpush.msra.mxu0 %v399
        %549 = vmatpush.msra.mxu0 %v397
        %550 = vmatpush.msra.mxu0 %v395
        %551 = vmatpush.msra.mxu0 %v393
        %552 = vmatpush.msra.mxu0 %v391
        %553 = vmatpush.msra.mxu0 %v389
        %554 = vmatpush.msra.mxu0 %v387
        %555 = vmatpush.msra.mxu0 %v385
        %556 = vmatpush.msra.mxu0 %v383
        %557 = vmatpush.msra.mxu0 %v381
        %558 = vmatmul.f32.gmra.mxu0 %v346
        %v559 = vpop.f32.mrf.mxu0
        %v560 = vadd.f32 %v537, %v559
        %561 = vmatmul.f32.gmra.mxu0 %v347
        %v562 = vpop.f32.mrf.mxu0
        %v563 = vadd.f32 %v540, %v562
        %564 = vdwg.mxu0
        %565 = vmatpush.msra.mxu0 %v443
        %566 = vmatpush.msra.mxu0 %v441
        %567 = vmatpush.msra.mxu0 %v439
        %568 = vmatpush.msra.mxu0 %v437
        %569 = vmatpush.msra.mxu0 %v435
        %570 = vmatpush.msra.mxu0 %v433
        %571 = vmatpush.msra.mxu0 %v431
        %572 = vmatpush.msra.mxu0 %v429
        %573 = vmatpush.msra.mxu0 %v427
        %574 = vmatpush.msra.mxu0 %v425
        %575 = vmatpush.msra.mxu0 %v423
        %576 = vmatpush.msra.mxu0 %v421
        %577 = vmatpush.msra.mxu0 %v419
        %578 = vmatpush.msra.mxu0 %v417
        %579 = vmatpush.msra.mxu0 %v415
        %580 = vmatpush.msra.mxu0 %v413
        %581 = vmatmul.f32.gmra.mxu0 %v293
        %v582 = vpop.f32.mrf.mxu0
        %v583 = vadd.f32 %v560, %v582
        %584 = vmatmul.f32.gmra.mxu0 %v294
        %v585 = vpop.f32.mrf.mxu0
        %v586 = vadd.f32 %v563, %v585
        %587 = vdwg.mxu0
        %v588 = vmax.f32 %v514, 0.0
        %v589 = vmax.f32 %v517, 0.0
        %v590 = vrot.slane %v588, 4
        %v591 = vrot.slane %v589, 4
        %vm592 = vcmp.lt.s32.totalorder %v296, 4
        %v593 = vsel %vm592, %v590, %v591
        %v594 = vsel %vm592, %v591, %v590
        %vm595 = vcmp.ge.s32.totalorder %v320, 4
        %vm596 = vcmp.ge.s32.totalorder %v321, 4
        %v597 = vsel %vm595, 1, 0
        %v598 = vsel %vm596, 1, 0
        %vm599 = vcmp.eq.s32.totalorder %v597, 1
        %vm600 = vcmp.eq.s32.totalorder %v598, 1
        %v601 = vsel %vm599, %v594, 0.0
        %v602 = vsel %vm600, %v593, 0.0
        %v603 = vrot.slane %v588, 6
        %v604 = vrot.slane %v589, 6
        %v605 = vsel %vm324, %v603, %v604
        %v606 = vsel %vm324, %v604, %v603
        %v607 = vsel %vm331, %v606, 0.0
        %v608 = vsel %vm332, %v605, 0.0
        %v609 = vld [vmem:[#allocation8] sm:$0xff]
        %v610 = vld [vmem:[#allocation8 + $0x8] sm:$0xff]
        %v611 = vld [vmem:[#allocation8 + $0x10] sm:$0xff]
        %v612 = vld [vmem:[#allocation8 + $0x18] sm:$0xff]
        %v613 = vld [vmem:[#allocation8 + $0x20] sm:$0xff]
        %v614 = vld [vmem:[#allocation8 + $0x28] sm:$0xff]
        %v615 = vld [vmem:[#allocation8 + $0x30] sm:$0xff]
        %v616 = vld [vmem:[#allocation8 + $0x38] sm:$0xff]
        %v617 = vld [vmem:[#allocation8 + $0x40] sm:$0xff]
        %v618 = vld [vmem:[#allocation8 + $0x48] sm:$0xff]
        %v619 = vld [vmem:[#allocation8 + $0x50] sm:$0xff]
        %v620 = vld [vmem:[#allocation8 + $0x58] sm:$0xff]
        %v621 = vld [vmem:[#allocation8 + $0x60] sm:$0xff]
        %v622 = vld [vmem:[#allocation8 + $0x68] sm:$0xff]
        %v623 = vld [vmem:[#allocation8 + $0x70] sm:$0xff]
        %v624 = vld [vmem:[#allocation8 + $0x78] sm:$0xff]
        %v625 = vld [vmem:[#allocation8 + $0x80] sm:$0xff]
        %v626 = vld [vmem:[#allocation8 + $0x88] sm:$0xff]
        %v627 = vld [vmem:[#allocation8 + $0x90] sm:$0xff]
        %v628 = vld [vmem:[#allocation8 + $0x98] sm:$0xff]
        %v629 = vld [vmem:[#allocation8 + $0xa0] sm:$0xff]
        %v630 = vld [vmem:[#allocation8 + $0xa8] sm:$0xff]
        %v631 = vld [vmem:[#allocation8 + $0xb0] sm:$0xff]
        %v632 = vld [vmem:[#allocation8 + $0xb8] sm:$0xff]
        %v633 = vld [vmem:[#allocation8 + $0xc0] sm:$0xff]
        %v634 = vld [vmem:[#allocation8 + $0xc8] sm:$0xff]
        %v635 = vld [vmem:[#allocation8 + $0xd0] sm:$0xff]
        %v636 = vld [vmem:[#allocation8 + $0xd8] sm:$0xff]
        %v637 = vld [vmem:[#allocation8 + $0xe0] sm:$0xff]
        %v638 = vld [vmem:[#allocation8 + $0xe8] sm:$0xff]
        %v639 = vld [vmem:[#allocation8 + $0xf0] sm:$0xff]
        %v640 = vld [vmem:[#allocation8 + $0xf8] sm:$0xff]
        %v641 = vld [vmem:[#allocation8 + $0x100] sm:$0xff]
        %v642 = vld [vmem:[#allocation8 + $0x108] sm:$0xff]
        %v643 = vld [vmem:[#allocation8 + $0x110] sm:$0xff]
        %v644 = vld [vmem:[#allocation8 + $0x118] sm:$0xff]
        %v645 = vld [vmem:[#allocation8 + $0x120] sm:$0xff]
        %v646 = vld [vmem:[#allocation8 + $0x128] sm:$0xff]
        %v647 = vld [vmem:[#allocation8 + $0x130] sm:$0xff]
        %v648 = vld [vmem:[#allocation8 + $0x138] sm:$0xff]
        %v649 = vld [vmem:[#allocation8 + $0x140] sm:$0xff]
        %v650 = vld [vmem:[#allocation8 + $0x148] sm:$0xff]
        %v651 = vld [vmem:[#allocation8 + $0x150] sm:$0xff]
        %v652 = vld [vmem:[#allocation8 + $0x158] sm:$0xff]
        %v653 = vld [vmem:[#allocation8 + $0x160] sm:$0xff]
        %v654 = vld [vmem:[#allocation8 + $0x168] sm:$0xff]
        %v655 = vld [vmem:[#allocation8 + $0x170] sm:$0xff]
        %v656 = vld [vmem:[#allocation8 + $0x178] sm:$0xff]
        %v657 = vld [vmem:[%s4] sm:$0x1]
        %v659 = vperm.slane %v657, 0
        %661 = vmatpush.msra.mxu0 %v624
        %662 = vmatpush.msra.mxu0 %v623
        %663 = vmatpush.msra.mxu0 %v622
        %664 = vmatpush.msra.mxu0 %v621
        %665 = vmatpush.msra.mxu0 %v620
        %666 = vmatpush.msra.mxu0 %v619
        %667 = vmatpush.msra.mxu0 %v618
        %668 = vmatpush.msra.mxu0 %v617
        %669 = vmatpush.msra.mxu0 %v616
        %670 = vmatpush.msra.mxu0 %v615
        %671 = vmatpush.msra.mxu0 %v614
        %672 = vmatpush.msra.mxu0 %v613
        %673 = vmatpush.msra.mxu0 %v612
        %674 = vmatpush.msra.mxu0 %v611
        %675 = vmatpush.msra.mxu0 %v610
        %676 = vmatpush.msra.mxu0 %v609
        %677 = vmatmul.f32.gmra.mxu0 %v601
        %v678 = vpop.f32.mrf.mxu0
        %v679 = vadd.f32 %v659, %v678
        %680 = vmatmul.f32.gmra.mxu0 %v602
        %v681 = vpop.f32.mrf.mxu0
        %v682 = vadd.f32 %v659, %v681
        %683 = vdwg.mxu0
        %684 = vmatpush.msra.mxu0 %v640
        %685 = vmatpush.msra.mxu0 %v639
        %686 = vmatpush.msra.mxu0 %v638
        %687 = vmatpush.msra.mxu0 %v637
        %688 = vmatpush.msra.mxu0 %v636
        %689 = vmatpush.msra.mxu0 %v635
        %690 = vmatpush.msra.mxu0 %v634
        %691 = vmatpush.msra.mxu0 %v633
        %692 = vmatpush.msra.mxu0 %v632
        %693 = vmatpush.msra.mxu0 %v631
        %694 = vmatpush.msra.mxu0 %v630
        %695 = vmatpush.msra.mxu0 %v629
        %696 = vmatpush.msra.mxu0 %v628
        %697 = vmatpush.msra.mxu0 %v627
        %698 = vmatpush.msra.mxu0 %v626
        %699 = vmatpush.msra.mxu0 %v625
        %700 = vmatmul.f32.gmra.mxu0 %v607
        %v701 = vpop.f32.mrf.mxu0
        %v702 = vadd.f32 %v679, %v701
        %703 = vmatmul.f32.gmra.mxu0 %v608
        %v704 = vpop.f32.mrf.mxu0
        %v705 = vadd.f32 %v682, %v704
        %706 = vdwg.mxu0
        %707 = vmatpush.msra.mxu0 %v656
        %708 = vmatpush.msra.mxu0 %v655
        %709 = vmatpush.msra.mxu0 %v654
        %710 = vmatpush.msra.mxu0 %v653
        %711 = vmatpush.msra.mxu0 %v652
        %712 = vmatpush.msra.mxu0 %v651
        %713 = vmatpush.msra.mxu0 %v650
        %714 = vmatpush.msra.mxu0 %v649
        %715 = vmatpush.msra.mxu0 %v648
        %716 = vmatpush.msra.mxu0 %v647
        %717 = vmatpush.msra.mxu0 %v646
        %718 = vmatpush.msra.mxu0 %v645
        %719 = vmatpush.msra.mxu0 %v644
        %720 = vmatpush.msra.mxu0 %v643
        %721 = vmatpush.msra.mxu0 %v642
        %722 = vmatpush.msra.mxu0 %v641
        %723 = vmatmul.f32.gmra.mxu0 %v588
        %v724 = vpop.f32.mrf.mxu0
        %v725 = vadd.f32 %v702, %v724
        %726 = vmatmul.f32.gmra.mxu0 %v589
        %v727 = vpop.f32.mrf.mxu0
        %v728 = vadd.f32 %v705, %v727
        %729 = vdwg.mxu0
        %v730 = vmax.f32 %v725, 0.0
        %v731 = vmax.f32 %v728, 0.0
        %v732 = vadd.f32 %v730, %v583
        %v733 = vadd.f32 %v731, %v586
        %v734 = vmax.f32 %v732, 0.0
        %v735 = vmax.f32 %v733, 0.0
        %736 = vst [vmem:[%s292] sm:$0xff] %v734
        %737 = vst [vmem:[%s292 + $0x8] sm:$0xff] %v735
        %s738 = sand.u32 %s142, 1
        %s739 = scalar_lea.sflag [#allocation4], %s738
        %s740 = sand.u32 %s142, 1
        %s741 = smul.addr %s740, 16
        %s742 = scalar_lea.vmem [#allocation10], %s741
        // Predicated region
        $region57: #{tpu_custom_call.1} parent=39 // pred_check
          %p743 = pneg %p152
        $region58: #{tpu_custom_call.1} parent=39 // pred_check_branch
          %745 = sbr.rel (%p743) target = $region60
        $region59: #{tpu_custom_call.1} parent=39 // pred_region
          %747 = vsyncadd %s739, 0
          %s748 = smul.addr %s24, 2
          %s749 = smul.addr %s748, 8
          %s750 = scalar_lea.hbm %s5, %s749
          %s751 = sshll.u32 %s742, 4
          %s752 = int_to_ptr.vmem [resolvable:$true] %s751
          %s753 = sshll.u32 %s750, 4
          %s754 = int_to_ptr.hbm [resolvable:$true] %s753
          %759 = dma.vmem_to_hbm [thread:$0]  %s752, 256, %s754, %s739, 128, 128, 8
        $region60: #{tpu_custom_call.1} parent=39 // pred_fallthru
          _
      $region40: #{tpu_custom_call.1} parent=5 // pred_fallthru
        _
      %p760 = scmp.le.s32.totalorder 2, %s19
      // Predicated region
      $region61: #{tpu_custom_call.1} parent=5 // pred_check
        %p761 = pneg %p760
      $region62: #{tpu_custom_call.1} parent=5 // pred_check_branch
        %763 = sbr.rel (%p761) target = $region64
      $region63: #{tpu_custom_call.1} parent=5 // pred_region
        %s764 = ssub.s32 %s19, 2
        // Predicated region
        $region65: #{tpu_custom_call.1} parent=63 // pred_check
          %p765 = pneg %p158
        $region66: #{tpu_custom_call.1} parent=63 // pred_check_branch
          %767 = sbr.rel (%p765) target = $region68
        $region67: #{tpu_custom_call.1} parent=63 // pred_region
          %s768 = sand.u32 %s143, 1
          %s769 = scalar_lea.sflag [#allocation4], %s768
          %s770 = sand.u32 %s143, 1
          %s771 = smul.addr %s770, 16
          %s772 = scalar_lea.vmem [#allocation10], %s771
          %774 = dma.done %s769, 256
        $region68: #{tpu_custom_call.1} parent=63 // pred_fallthru
          _
      $region64: #{tpu_custom_call.1} parent=5 // pred_fallthru
        _
    $region6: #{tpu_custom_call.1} parent=1 // loop_footer
      %s23 = sadd.s32 1, %s19
    $region7: #{tpu_custom_call.1} parent=1 // loop_footer_branch
      %18 = sbr.rel target = $region3
    $region8: #{tpu_custom_call.1} parent=1 // loop_exit
      _
    %775 = vsyncpa [#allocation3], 1
    %s776 = scalar_lea.sflag [#allocation3], 1
    %777 = vsyncpa %s776, 1
    %778 = vsyncpa [#allocation6], 1
    %779 = vsyncpa [#allocation9], 1
    %780 = vsyncpa [#allocation4], 1
    %s781 = scalar_lea.sflag [#allocation4], 1
    %782 = vsyncpa %s781, 1

// kernel: tpu_custom_call.1
$region0: #{tpu_custom_call.1}
  #allocation0 [shape = 'u32[]', space=smem, size = 0x4, offset = 0x4, fixed_abs, tag = 'smem constant byte address 0x4 - core index']
  #allocation1 [shape = 'u32[72,128]{1,0:T(1,128)}', space=vmem, size = 0x9000, scoped, tag = 'internal scratch']
  %s0 = inlined_call_operand.hbm [shape: f32[2,16,128], index: 0, kind: input, shape index: {}]
  %s1 = inlined_call_operand.hbm [shape: f32[384,256], index: 1, kind: input, shape index: {}]
  %s2 = inlined_call_operand.hbm [shape: f32[1,256], index: 2, kind: input, shape index: {}]
  %s3 = inlined_call_operand.hbm [shape: f32[384,128], index: 3, kind: input, shape index: {}]
  %s4 = inlined_call_operand.vmem [shape: f32[1,128], index: 4, kind: input, shape index: {}]
  %s5 = inlined_call_operand.hbm [shape: f32[2,16,128], index: 5, kind: output, shape index: {}]
  %s6 = sld [smem:[#allocation0]]
  $region69: #{tpu_custom_call.1} parent=0
    _
  %s8 = ssub.s32 1, %s6
  %s9 = scalar_select 0, %s8, %s6
  $region1: #{tpu_custom_call.1} parent=0
    #allocation2 [shape = 'u8[16384]{0}', space=vmem, size = 0x4000, scoped, tag = 'input window, operand 0']
    #allocation3 [shape = 's32[2]{0}', space=sflag, size = 0x8, scoped, tag = 'scoped memory for tpu_custom_call.1']
    #allocation4 [shape = 's32[2]{0}', space=sflag, size = 0x8, scoped, tag = 'scoped memory for tpu_custom_call.1']
    #allocation5 [shape = 'u8[393216]{0}', space=vmem, size = 0x60000, scoped, tag = 'input window, operand 1, single buffered']
    #allocation6 [shape = 's32[1]{0}', space=sflag, size = 0x4, scoped, tag = 'scoped memory for tpu_custom_call.1']
    #allocation7 [shape = 'u8[1024]{0}', space=vmem, size = 0x400, scoped, tag = 'input window, operand 2, single buffered']
    #allocation8 [shape = 'u8[196608]{0}', space=vmem, size = 0x30000, scoped, tag = 'input window, operand 3, single buffered']
    #allocation9 [shape = 's32[1]{0}', space=sflag, size = 0x4, scoped, tag = 'scoped memory for tpu_custom_call.1']
    #allocation10 [shape = 'u8[16384]{0}', space=vmem, size = 0x4000, scoped, tag = 'output window, operand 0']
    %10 = vsyncpa [#allocation3], 0
    %s11 = scalar_lea.sflag [#allocation3], 1
    %12 = vsyncpa %s11, 0
    %13 = vsyncpa [#allocation6], 0
    %14 = vsyncpa [#allocation9], 0
    %15 = vsyncpa [#allocation4], 0
    %s16 = scalar_lea.sflag [#allocation4], 1
    %17 = vsyncpa %s16, 0
    loop: start=0, step=1, limit=4
    $region2: #{tpu_custom_call.1} parent=1 // loop_pre_header
      _
    $region3: #{tpu_custom_call.1} parent=1 // loop_header
      %s19 = sphi 0, %s23
      %p20 = scmp.ge.s32.totalorder %s19, 4
      %s29 = sphi 0, %s31
      %s32 = sphi 0, %s29
      %s33 = sphi 0, %s32
      %s49 = sphi 0, %s33
      %s53 = sphi 0, %s53
      %s55 = sphi 0, %s53
      %s56 = sphi 0, %s55
      %s70 = sphi 0, %s56
      %s74 = sphi 0, %s74
      %s76 = sphi 0, %s74
      %s77 = sphi 0, %s76
      %s91 = sphi 0, %s77
      %s95 = sphi 0, %s95
      %s97 = sphi 0, %s95
      %s98 = sphi 0, %s97
      %s112 = sphi 0, %s98
      %s116 = sphi 0, %s116
      %s118 = sphi 0, %s116
      %s119 = sphi 0, %s118
      %s133 = sphi 0, %s119
      %s139 = sphi 0, %s141
      %s142 = sphi 0, %s139
      %s143 = sphi 0, %s142
      %s159 = sphi 0, %s143
    $region4: #{tpu_custom_call.1} parent=1 // loop_header_branch
      %22 = sbr.rel (%p20) target = $region8
    $region5: #{tpu_custom_call.1} parent=1 // loop_body
      %s24 = ssub.s32 %s19, 1
      %s25 = ssub.s32 %s19, 2
      %s26 = sadd.s32 %s19, 1
      %s27 = ssub.s32 %s19, %s26
      %p28 = scmp.eq.s32.totalorder %s27, 0
      %s30 = sadd.s32 %s29, 1
      %s31 = scalar_select %p28, %s29, %s30
      %p34 = pneg %p28
      %p35 = scmp.eq.s32.totalorder %s19, 1
      %p36 = por %p34, %p35
      %p37 = scmp.ne.s32.totalorder %s29, %s32
      %p38 = scmp.eq.s32.totalorder %s19, 0
      %p39 = por %p37, %p38
      %p40 = scmp.ne.s32.totalorder %s29, %s32
      %p41 = scmp.eq.s32.totalorder %s24, 1
      %p42 = por %p40, %p41
      %p43 = scmp.ne.s32.totalorder %s32, %s33
      %p44 = scmp.eq.s32.totalorder %s24, 0
      %p45 = por %p43, %p44
      %p46 = scmp.ne.s32.totalorder %s32, %s33
      %p47 = scmp.eq.s32.totalorder %s25, 1
      %p48 = por %p46, %p47
      %p50 = scmp.ne.s32.totalorder %s33, %s49
      %p51 = scmp.eq.s32.totalorder %s25, 0
      %p52 = por %p50, %p51
      %s54 = sadd.s32 %s53, 1
      %p57 = scmp.eq.s32.totalorder %s19, 1
      %p58 = scmp.ne.s32.totalorder %s53, %s55
      %p59 = scmp.eq.s32.totalorder %s19, 0
      %p60 = por %p58, %p59
      %p61 = scmp.ne.s32.totalorder %s53, %s55
      %p62 = scmp.eq.s32.totalorder %s24, 1
      %p63 = por %p61, %p62
      %p64 = scmp.ne.s32.totalorder %s55, %s56
      %p65 = scmp.eq.s32.totalorder %s24, 0
      %p66 = por %p64, %p65
      %p67 = scmp.ne.s32.totalorder %s55, %s56
      %p68 = scmp.eq.s32.totalorder %s25, 1
      %p69 = por %p67, %p68
      %p71 = scmp.ne.s32.totalorder %s56, %s70
      %p72 = scmp.eq.s32.totalorder %s25, 0
      %p73 = por %p71, %p72
      %s75 = sadd.s32 %s74, 1
      %p78 = scmp.eq.s32.totalorder %s19, 1
      %p79 = scmp.ne.s32.totalorder %s74, %s76
      %p80 = scmp.eq.s32.totalorder %s19, 0
      %p81 = por %p79, %p80
      %p82 = scmp.ne.s32.totalorder %s74, %s76
      %p83 = scmp.eq.s32.totalorder %s24, 1
      %p84 = por %p82, %p83
      %p85 = scmp.ne.s32.totalorder %s76, %s77
      %p86 = scmp.eq.s32.totalorder %s24, 0
      %p87 = por %p85, %p86
      %p88 = scmp.ne.s32.totalorder %s76, %s77
      %p89 = scmp.eq.s32.totalorder %s25, 1
      %p90 = por %p88, %p89
      %p92 = scmp.ne.s32.totalorder %s77, %s91
      %p93 = scmp.eq.s32.totalorder %s25, 0
      %p94 = por %p92, %p93
      %s96 = sadd.s32 %s95, 1
      %p99 = scmp.eq.s32.totalorder %s19, 1
      %p100 = scmp.ne.s32.totalorder %s95, %s97
      %p101 = scmp.eq.s32.totalorder %s19, 0
      %p102 = por %p100, %p101
      %p103 = scmp.ne.s32.totalorder %s95, %s97
      %p104 = scmp.eq.s32.totalorder %s24, 1
      %p105 = por %p103, %p104
      %p106 = scmp.ne.s32.totalorder %s97, %s98
      %p107 = scmp.eq.s32.totalorder %s24, 0
      %p108 = por %p106, %p107
      %p109 = scmp.ne.s32.totalorder %s97, %s98
      %p110 = scmp.eq.s32.totalorder %s25, 1
      %p111 = por %p109, %p110
      %p113 = scmp.ne.s32.totalorder %s98, %s112
      %p114 = scmp.eq.s32.totalorder %s25, 0
      %p115 = por %p113, %p114
      %s117 = sadd.s32 %s116, 1
      %p120 = scmp.eq.s32.totalorder %s19, 1
      %p121 = scmp.ne.s32.totalorder %s116, %s118
      %p122 = scmp.eq.s32.totalorder %s19, 0
      %p123 = por %p121, %p122
      %p124 = scmp.ne.s32.totalorder %s116, %s118
      %p125 = scmp.eq.s32.totalorder %s24, 1
      %p126 = por %p124, %p125
      %p127 = scmp.ne.s32.totalorder %s118, %s119
      %p128 = scmp.eq.s32.totalorder %s24, 0
      %p129 = por %p127, %p128
      %p130 = scmp.ne.s32.totalorder %s118, %s119
      %p131 = scmp.eq.s32.totalorder %s25, 1
      %p132 = por %p130, %p131
      %p134 = scmp.ne.s32.totalorder %s119, %s133
      %p135 = scmp.eq.s32.totalorder %s25, 0
      %p136 = por %p134, %p135
      %s137 = ssub.s32 %s19, %s26
      %p138 = scmp.eq.s32.totalorder %s137, 0
      %s140 = sadd.s32 %s139, 1
      %s141 = scalar_select %p138, %s139, %s140
      %p144 = pneg %p138
      %p145 = scmp.eq.s32.totalorder %s19, 1
      %p146 = por %p144, %p145
      %p147 = scmp.ne.s32.totalorder %s139, %s142
      %p148 = scmp.eq.s32.totalorder %s19, 0
      %p149 = por %p147, %p148
      %p150 = scmp.ne.s32.totalorder %s139, %s142
      %p151 = scmp.eq.s32.totalorder %s24, 1
      %p152 = por %p150, %p151
      %p153 = scmp.ne.s32.totalorder %s142, %s143
      %p154 = scmp.eq.s32.totalorder %s24, 0
      %p155 = por %p153, %p154
      %p156 = scmp.ne.s32.totalorder %s142, %s143
      %p157 = scmp.eq.s32.totalorder %s25, 1
      %p158 = por %p156, %p157
      %p160 = scmp.ne.s32.totalorder %s143, %s159
      %p161 = scmp.eq.s32.totalorder %s25, 0
      %p162 = por %p160, %p161
      %p163 = scmp.le.s32.totalorder 1, %s19
      %p164 = scmp.lt.s32.totalorder %s19, 3
      %p165 = pnand %p163, %p164
      %p166 = pneg %p165
      // Predicated region
      $region9: #{tpu_custom_call.1} parent=5 // pred_check
        _
      $region10: #{tpu_custom_call.1} parent=5 // pred_check_branch
        %168 = sbr.rel (%p165) target = $region12
      $region11: #{tpu_custom_call.1} parent=5 // pred_region
        %s169 = ssub.s32 %s19, 1
        // Predicated region
        $region13: #{tpu_custom_call.1} parent=11 // pred_check
          %p170 = pneg %p66
        $region14: #{tpu_custom_call.1} parent=11 // pred_check_branch
          %172 = sbr.rel (%p170) target = $region16
        $region15: #{tpu_custom_call.1} parent=11 // pred_region
          %174 = vsyncadd [#allocation6], 0
          %s175 = sshll.u32 %s1, 4
          %s176 = int_to_ptr.hbm [resolvable:$true] %s175
          %s177 = sshll.u32 [#allocation5], 4
          %s178 = int_to_ptr.vmem [resolvable:$true] %s177
          %183 = dma.hbm_to_vmem [thread:$0]  %s176, 12288, %s178, [#allocation6], 256, 256, 16
        $region16: #{tpu_custom_call.1} parent=11 // pred_fallthru
          _
        // Predicated region
        $region17: #{tpu_custom_call.1} parent=11 // pred_check
          %p184 = pneg %p87
        $region18: #{tpu_custom_call.1} parent=11 // pred_check_branch
          %186 = sbr.rel (%p184) target = $region20
        $region19: #{tpu_custom_call.1} parent=11 // pred_region
          %188 = vsyncadd [#allocation6], 0
          %s190 = sshll.u32 %s2, 4
          %s191 = int_to_ptr.hbm [resolvable:$true] %s190
          %s192 = sshll.u32 [#allocation7], 4
          %s193 = int_to_ptr.vmem [resolvable:$true] %s192
          %195 = dma.hbm_to_vmem [thread:$0]  %s191, 32, %s193, [#allocation6]
        $region20: #{tpu_custom_call.1} parent=11 // pred_fallthru
          _
        // Predicated region
        $region21: #{tpu_custom_call.1} parent=11 // pred_check
          %p196 = pneg %p108
        $region22: #{tpu_custom_call.1} parent=11 // pred_check_branch
          %198 = sbr.rel (%p196) target = $region24
        $region23: #{tpu_custom_call.1} parent=11 // pred_region
          %200 = vsyncadd [#allocation9], 0
          %s201 = sshll.u32 %s3, 4
          %s202 = int_to_ptr.hbm [resolvable:$true] %s201
          %s203 = sshll.u32 [#allocation8], 4
          %s204 = int_to_ptr.vmem [resolvable:$true] %s203
          %209 = dma.hbm_to_vmem [thread:$0]  %s202, 6144, %s204, [#allocation9], 128, 128, 8
        $region24: #{tpu_custom_call.1} parent=11 // pred_fallthru
          _
        // Predicated region
        $region25: #{tpu_custom_call.1} parent=11 // pred_check
          %p210 = pneg %p129
        $region26: #{tpu_custom_call.1} parent=11 // pred_check_branch
          %212 = sbr.rel (%p210) target = $region28
        $region27: #{tpu_custom_call.1} parent=11 // pred_region
          _
        $region28: #{tpu_custom_call.1} parent=11 // pred_fallthru
          _
      $region12: #{tpu_custom_call.1} parent=5 // pred_fallthru
        _
      %p213 = scmp.lt.s32.totalorder %s19, 2
      // Predicated region
      $region29: #{tpu_custom_call.1} parent=5 // pred_check
        %p214 = pneg %p213
      $region30: #{tpu_custom_call.1} parent=5 // pred_check_branch
        %216 = sbr.rel (%p214) target = $region32
      $region31: #{tpu_custom_call.1} parent=5 // pred_region
        // Predicated region
        $region33: #{tpu_custom_call.1} parent=31 // pred_check
          %p217 = pneg %p39
        $region34: #{tpu_custom_call.1} parent=31 // pred_check_branch
          %219 = sbr.rel (%p217) target = $region36
        $region35: #{tpu_custom_call.1} parent=31 // pred_region
          %s220 = sand.u32 %s29, 1
          %s221 = scalar_lea.sflag [#allocation3], %s220
          %s222 = sand.u32 %s29, 1
          %s223 = smul.addr %s222, 16
          %s224 = scalar_lea.vmem [#allocation2], %s223
          %226 = vsyncadd %s221, 0
          %s227 = smul.addr %s19, 2
          %s228 = smul.addr %s227, 8
          %s229 = scalar_lea.hbm %s0, %s228
          %s230 = sshll.u32 %s229, 4
          %s231 = int_to_ptr.hbm [resolvable:$true] %s230
          %s232 = sshll.u32 %s224, 4
          %s233 = int_to_ptr.vmem [resolvable:$true] %s232
          %238 = dma.hbm_to_vmem [thread:$0]  %s231, 256, %s233, %s221, 128, 128, 8
        $region36: #{tpu_custom_call.1} parent=31 // pred_fallthru
          _
      $region32: #{tpu_custom_call.1} parent=5 // pred_fallthru
        _
      %p239 = scmp.le.s32.totalorder 1, %s19
      %p240 = scmp.lt.s32.totalorder %s19, 3
      %p241 = pnand %p239, %p240
      %p242 = pneg %p241
      // Predicated region
      $region37: #{tpu_custom_call.1} parent=5 // pred_check
        _
      $region38: #{tpu_custom_call.1} parent=5 // pred_check_branch
        %244 = sbr.rel (%p241) target = $region40
      $region39: #{tpu_custom_call.1} parent=5 // pred_region
        %s245 = ssub.s32 %s19, 1
        %s246 = sand.u32 %s32, 1
        %s247 = scalar_lea.sflag [#allocation3], %s246
        %s248 = sand.u32 %s32, 1
        %s249 = smul.addr %s248, 16
        %s250 = scalar_lea.vmem [#allocation2], %s249
        // Predicated region
        $region41: #{tpu_custom_call.1} parent=39 // pred_check
          %p251 = pneg %p45
        $region42: #{tpu_custom_call.1} parent=39 // pred_check_branch
          %253 = sbr.rel (%p251) target = $region44
        $region43: #{tpu_custom_call.1} parent=39 // pred_region
          %255 = dma.done %s247, 256
        $region44: #{tpu_custom_call.1} parent=39 // pred_fallthru
          _
        // Predicated region
        $region45: #{tpu_custom_call.1} parent=39 // pred_check
          %p256 = pneg %p66
        $region46: #{tpu_custom_call.1} parent=39 // pred_check_branch
          %258 = sbr.rel (%p256) target = $region48
        $region47: #{tpu_custom_call.1} parent=39 // pred_region
          %260 = dma.done [#allocation6], 12288
        $region48: #{tpu_custom_call.1} parent=39 // pred_fallthru
          _
        // Predicated region
        $region49: #{tpu_custom_call.1} parent=39 // pred_check
          %p261 = pneg %p87
        $region50: #{tpu_custom_call.1} parent=39 // pred_check_branch
          %263 = sbr.rel (%p261) target = $region52
        $region51: #{tpu_custom_call.1} parent=39 // pred_region
          %265 = dma.done [#allocation6], 32
        $region52: #{tpu_custom_call.1} parent=39 // pred_fallthru
          _
        // Predicated region
        $region53: #{tpu_custom_call.1} parent=39 // pred_check
          %p266 = pneg %p108
        $region54: #{tpu_custom_call.1} parent=39 // pred_check_branch
          %268 = sbr.rel (%p266) target = $region56
        $region55: #{tpu_custom_call.1} parent=39 // pred_region
          %270 = dma.done [#allocation9], 6144
        $region56: #{tpu_custom_call.1} parent=39 // pred_fallthru
          _
        %s271 = sand.u32 %s32, 1
        %s272 = scalar_lea.sflag [#allocation3], %s271
        %s273 = sand.u32 %s32, 1
        %s274 = smul.addr %s273, 16
        %s275 = scalar_lea.vmem [#allocation2], %s274
        %p276 = pneg %p45
        %p277 = pneg %p42
        %p278 = pneg %p66
        %p279 = pneg %p63
        %p280 = pneg %p87
        %p281 = pneg %p84
        %p282 = pneg %p108
        %p283 = pneg %p105
        %p284 = pneg %p129
        %p285 = pneg %p126
        %p286 = pneg %p155
        %p287 = pneg %p152
        %s288 = sand.u32 %s142, 1
        %s289 = scalar_lea.sflag [#allocation4], %s288
        %s290 = sand.u32 %s142, 1
        %s291 = smul.addr %s290, 16
        %s292 = scalar_lea.vmem [#allocation10], %s291
        %v293 = vld [vmem:[%s250] sm:$0xff]
        %v294 = vld [vmem:[%s250 + $0x8] sm:$0xff]
        %v295 = vlaneseq
        %v296 = vshrl.u32 %v295, 7
        %v297 = vadd.s32 %v296, 8
        %vm298 = vcmp.lt.s32.totalorder %v296, 0
        %v299 = vsub.s32 0, %v296
        %v300 = vsel %vm298, %v299, %v296
        %v301 = vshrl.u32 %v300, 4
        %v302 = vand.u32 %v300, 15
        %v303 = vsub.s32 0, %v302
        %v304 = vsel %vm298, %v303, %v302
        %vm305 = vcmp.lt.s32.totalorder %v297, 0
        %v306 = vsub.s32 0, %v297
        %v307 = vsel %vm305, %v306, %v297
        %v308 = vshrl.u32 %v307, 4
        %v309 = vand.u32 %v307, 15
        %v310 = vsub.s32 0, %v309
        %v311 = vsel %vm305, %v310, %v309
        %vm312 = vcmp.ne.s32.totalorder %v304, 0
        %vm313 = vcmp.ne.s32.totalorder %v311, 0
        %vm314 = vcmp.lt.s32.totalorder %v304, 0
        %vm315 = vcmp.lt.s32.totalorder %v311, 0
        %vm316 = vmand %vm314, %vm312
        %vm317 = vmand %vm315, %vm313
        %v318 = vadd.s32 %v304, 16
        %v319 = vadd.s32 %v311, 16
        %v320 = vsel %vm316, %v318, %v304
        %v321 = vsel %vm317, %v319, %v311
        %v322 = vrot.slane %v293, 6
        %v323 = vrot.slane %v294, 6
        %vm324 = vcmp.lt.s32.totalorder %v296, 2
        %v325 = vsel %vm324, %v322, %v323
        %v326 = vsel %vm324, %v323, %v322
        %vm327 = vcmp.ge.s32.totalorder %v320, 2
        %vm328 = vcmp.ge.s32.totalorder %v321, 2
        %v329 = vsel %vm327, 1, 0
        %v330 = vsel %vm328, 1, 0
        %vm331 = vcmp.eq.s32.totalorder %v329, 1
        %vm332 = vcmp.eq.s32.totalorder %v330, 1
        %v333 = vsel %vm331, %v326, 0.0
        %v334 = vsel %vm332, %v325, 0.0
        %v335 = vrot.slane %v293, 7
        %v336 = vrot.slane %v294, 7
        %vm337 = vcmp.lt.s32.totalorder %v296, 1
        %v338 = vsel %vm337, %v335, %v336
        %v339 = vsel %vm337, %v336, %v335
        %vm340 = vcmp.ge.s32.totalorder %v320, 1
        %vm341 = vcmp.ge.s32.totalorder %v321, 1
        %v342 = vsel %vm340, 1, 0
        %v343 = vsel %vm341, 1, 0
        %vm344 = vcmp.eq.s32.totalorder %v342, 1
        %vm345 = vcmp.eq.s32.totalorder %v343, 1
        %v346 = vsel %vm344, %v339, 0.0
        %v347 = vsel %vm345, %v338, 0.0
        %v348 = vld [vmem:[#allocation5] sm:$0xff]
        %v349 = vld [vmem:[#allocation5 + $0x8] sm:$0xff]
        %v350 = vld [vmem:[#allocation5 + $0x10] sm:$0xff]
        %v351 = vld [vmem:[#allocation5 + $0x18] sm:$0xff]
        %v352 = vld [vmem:[#allocation5 + $0x20] sm:$0xff]
        %v353 = vld [vmem:[#allocation5 + $0x28] sm:$0xff]
        %v354 = vld [vmem:[#allocation5 + $0x30] sm:$0xff]
        %v355 = vld [vmem:[#allocation5 + $0x38] sm:$0xff]
        %v356 = vld [vmem:[#allocation5 + $0x40] sm:$0xff]
        %v357 = vld [vmem:[#allocation5 + $0x48] sm:$0xff]
        %v358 = vld [vmem:[#allocation5 + $0x50] sm:$0xff]
        %v359 = vld [vmem:[#allocation5 + $0x58] sm:$0xff]
        %v360 = vld [vmem:[#allocation5 + $0x60] sm:$0xff]
        %v361 = vld [vmem:[#allocation5 + $0x68] sm:$0xff]
        %v362 = vld [vmem:[#allocation5 + $0x70] sm:$0xff]
        %v363 = vld [vmem:[#allocation5 + $0x78] sm:$0xff]
        %v364 = vld [vmem:[#allocation5 + $0x80] sm:$0xff]
        %v365 = vld [vmem:[#allocation5 + $0x88] sm:$0xff]
        %v366 = vld [vmem:[#allocation5 + $0x90] sm:$0xff]
        %v367 = vld [vmem:[#allocation5 + $0x98] sm:$0xff]
        %v368 = vld [vmem:[#allocation5 + $0xa0] sm:$0xff]
        %v369 = vld [vmem:[#allocation5 + $0xa8] sm:$0xff]
        %v370 = vld [vmem:[#allocation5 + $0xb0] sm:$0xff]
        %v371 = vld [vmem:[#allocation5 + $0xb8] sm:$0xff]
        %v372 = vld [vmem:[#allocation5 + $0xc0] sm:$0xff]
        %v373 = vld [vmem:[#allocation5 + $0xc8] sm:$0xff]
        %v374 = vld [vmem:[#allocation5 + $0xd0] sm:$0xff]
        %v375 = vld [vmem:[#allocation5 + $0xd8] sm:$0xff]
        %v376 = vld [vmem:[#allocation5 + $0xe0] sm:$0xff]
        %v377 = vld [vmem:[#allocation5 + $0xe8] sm:$0xff]
        %v378 = vld [vmem:[#allocation5 + $0xf0] sm:$0xff]
        %v379 = vld [vmem:[#allocation5 + $0xf8] sm:$0xff]
        %v380 = vld [vmem:[#allocation5 + $0x100] sm:$0xff]
        %v381 = vld [vmem:[#allocation5 + $0x108] sm:$0xff]
        %v382 = vld [vmem:[#allocation5 + $0x110] sm:$0xff]
        %v383 = vld [vmem:[#allocation5 + $0x118] sm:$0xff]
        %v384 = vld [vmem:[#allocation5 + $0x120] sm:$0xff]
        %v385 = vld [vmem:[#allocation5 + $0x128] sm:$0xff]
        %v386 = vld [vmem:[#allocation5 + $0x130] sm:$0xff]
        %v387 = vld [vmem:[#allocation5 + $0x138] sm:$0xff]
        %v388 = vld [vmem:[#allocation5 + $0x140] sm:$0xff]
        %v389 = vld [vmem:[#allocation5 + $0x148] sm:$0xff]
        %v390 = vld [vmem:[#allocation5 + $0x150] sm:$0xff]
        %v391 = vld [vmem:[#allocation5 + $0x158] sm:$0xff]
        %v392 = vld [vmem:[#allocation5 + $0x160] sm:$0xff]
        %v393 = vld [vmem:[#allocation5 + $0x168] sm:$0xff]
        %v394 = vld [vmem:[#allocation5 + $0x170] sm:$0xff]
        %v395 = vld [vmem:[#allocation5 + $0x178] sm:$0xff]
        %v396 = vld [vmem:[#allocation5 + $0x180] sm:$0xff]
        %v397 = vld [vmem:[#allocation5 + $0x188] sm:$0xff]
        %v398 = vld [vmem:[#allocation5 + $0x190] sm:$0xff]
        %v399 = vld [vmem:[#allocation5 + $0x198] sm:$0xff]
        %v400 = vld [vmem:[#allocation5 + $0x1a0] sm:$0xff]
        %v401 = vld [vmem:[#allocation5 + $0x1a8] sm:$0xff]
        %v402 = vld [vmem:[#allocation5 + $0x1b0] sm:$0xff]
        %v403 = vld [vmem:[#allocation5 + $0x1b8] sm:$0xff]
        %v404 = vld [vmem:[#allocation5 + $0x1c0] sm:$0xff]
        %v405 = vld [vmem:[#allocation5 + $0x1c8] sm:$0xff]
        %v406 = vld [vmem:[#allocation5 + $0x1d0] sm:$0xff]
        %v407 = vld [vmem:[#allocation5 + $0x1d8] sm:$0xff]
        %v408 = vld [vmem:[#allocation5 + $0x1e0] sm:$0xff]
        %v409 = vld [vmem:[#allocation5 + $0x1e8] sm:$0xff]
        %v410 = vld [vmem:[#allocation5 + $0x1f0] sm:$0xff]
        %v411 = vld [vmem:[#allocation5 + $0x1f8] sm:$0xff]
        %v412 = vld [vmem:[#allocation5 + $0x200] sm:$0xff]
        %v413 = vld [vmem:[#allocation5 + $0x208] sm:$0xff]
        %v414 = vld [vmem:[#allocation5 + $0x210] sm:$0xff]
        %v415 = vld [vmem:[#allocation5 + $0x218] sm:$0xff]
        %v416 = vld [vmem:[#allocation5 + $0x220] sm:$0xff]
        %v417 = vld [vmem:[#allocation5 + $0x228] sm:$0xff]
        %v418 = vld [vmem:[#allocation5 + $0x230] sm:$0xff]
        %v419 = vld [vmem:[#allocation5 + $0x238] sm:$0xff]
        %v420 = vld [vmem:[#allocation5 + $0x240] sm:$0xff]
        %v421 = vld [vmem:[#allocation5 + $0x248] sm:$0xff]
        %v422 = vld [vmem:[#allocation5 + $0x250] sm:$0xff]
        %v423 = vld [vmem:[#allocation5 + $0x258] sm:$0xff]
        %v424 = vld [vmem:[#allocation5 + $0x260] sm:$0xff]
        %v425 = vld [vmem:[#allocation5 + $0x268] sm:$0xff]
        %v426 = vld [vmem:[#allocation5 + $0x270] sm:$0xff]
        %v427 = vld [vmem:[#allocation5 + $0x278] sm:$0xff]
        %v428 = vld [vmem:[#allocation5 + $0x280] sm:$0xff]
        %v429 = vld [vmem:[#allocation5 + $0x288] sm:$0xff]
        %v430 = vld [vmem:[#allocation5 + $0x290] sm:$0xff]
        %v431 = vld [vmem:[#allocation5 + $0x298] sm:$0xff]
        %v432 = vld [vmem:[#allocation5 + $0x2a0] sm:$0xff]
        %v433 = vld [vmem:[#allocation5 + $0x2a8] sm:$0xff]
        %v434 = vld [vmem:[#allocation5 + $0x2b0] sm:$0xff]
        %v435 = vld [vmem:[#allocation5 + $0x2b8] sm:$0xff]
        %v436 = vld [vmem:[#allocation5 + $0x2c0] sm:$0xff]
        %v437 = vld [vmem:[#allocation5 + $0x2c8] sm:$0xff]
        %v438 = vld [vmem:[#allocation5 + $0x2d0] sm:$0xff]
        %v439 = vld [vmem:[#allocation5 + $0x2d8] sm:$0xff]
        %v440 = vld [vmem:[#allocation5 + $0x2e0] sm:$0xff]
        %v441 = vld [vmem:[#allocation5 + $0x2e8] sm:$0xff]
        %v442 = vld [vmem:[#allocation5 + $0x2f0] sm:$0xff]
        %v443 = vld [vmem:[#allocation5 + $0x2f8] sm:$0xff]
        %v444 = vld [vmem:[#allocation7] sm:$0x3]
        %v446 = vperm.slane %v444, 0
        %v447 = vperm.slane %v444, 1
        %450 = vmatpush.msra.mxu0 %v378
        %451 = vmatpush.msra.mxu0 %v376
        %452 = vmatpush.msra.mxu0 %v374
        %453 = vmatpush.msra.mxu0 %v372
        %454 = vmatpush.msra.mxu0 %v370
        %455 = vmatpush.msra.mxu0 %v368
        %456 = vmatpush.msra.mxu0 %v366
        %457 = vmatpush.msra.mxu0 %v364
        %458 = vmatpush.msra.mxu0 %v362
        %459 = vmatpush.msra.mxu0 %v360
        %460 = vmatpush.msra.mxu0 %v358
        %461 = vmatpush.msra.mxu0 %v356
        %462 = vmatpush.msra.mxu0 %v354
        %463 = vmatpush.msra.mxu0 %v352
        %464 = vmatpush.msra.mxu0 %v350
        %465 = vmatpush.msra.mxu0 %v348
        %466 = vmatmul.f32.gmra.mxu0 %v333
        %v467 = vpop.f32.mrf.mxu0
        %v468 = vadd.f32 %v446, %v467
        %469 = vmatmul.f32.gmra.mxu0 %v334
        %v470 = vpop.f32.mrf.mxu0
        %v471 = vadd.f32 %v446, %v470
        %472 = vdwg.mxu0
        %473 = vmatpush.msra.mxu0 %v410
        %474 = vmatpush.msra.mxu0 %v408
        %475 = vmatpush.msra.mxu0 %v406
        %476 = vmatpush.msra.mxu0 %v404
        %477 = vmatpush.msra.mxu0 %v402
        %478 = vmatpush.msra.mxu0 %v400
        %479 = vmatpush.msra.mxu0 %v398
        %480 = vmatpush.msra.mxu0 %v396
        %481 = vmatpush.msra.mxu0 %v394
        %482 = vmatpush.msra.mxu0 %v392
        %483 = vmatpush.msra.mxu0 %v390
        %484 = vmatpush.msra.mxu0 %v388
        %485 = vmatpush.msra.mxu0 %v386
        %486 = vmatpush.msra.mxu0 %v384
        %487 = vmatpush.msra.mxu0 %v382
        %488 = vmatpush.msra.mxu0 %v380
        %489 = vmatmul.f32.gmra.mxu0 %v346
        %v490 = vpop.f32.mrf.mxu0
        %v491 = vadd.f32 %v468, %v490
        %492 = vmatmul.f32.gmra.mxu0 %v347
        %v493 = vpop.f32.mrf.mxu0
        %v494 = vadd.f32 %v471, %v493
        %495 = vdwg.mxu0
        %496 = vmatpush.msra.mxu0 %v442
        %497 = vmatpush.msra.mxu0 %v440
        %498 = vmatpush.msra.mxu0 %v438
        %499 = vmatpush.msra.mxu0 %v436
        %500 = vmatpush.msra.mxu0 %v434
        %501 = vmatpush.msra.mxu0 %v432
        %502 = vmatpush.msra.mxu0 %v430
        %503 = vmatpush.msra.mxu0 %v428
        %504 = vmatpush.msra.mxu0 %v426
        %505 = vmatpush.msra.mxu0 %v424
        %506 = vmatpush.msra.mxu0 %v422
        %507 = vmatpush.msra.mxu0 %v420
        %508 = vmatpush.msra.mxu0 %v418
        %509 = vmatpush.msra.mxu0 %v416
        %510 = vmatpush.msra.mxu0 %v414
        %511 = vmatpush.msra.mxu0 %v412
        %512 = vmatmul.f32.gmra.mxu0 %v293
        %v513 = vpop.f32.mrf.mxu0
        %v514 = vadd.f32 %v491, %v513
        %515 = vmatmul.f32.gmra.mxu0 %v294
        %v516 = vpop.f32.mrf.mxu0
        %v517 = vadd.f32 %v494, %v516
        %518 = vdwg.mxu0
        %519 = vmatpush.msra.mxu0 %v379
        %520 = vmatpush.msra.mxu0 %v377
        %521 = vmatpush.msra.mxu0 %v375
        %522 = vmatpush.msra.mxu0 %v373
        %523 = vmatpush.msra.mxu0 %v371
        %524 = vmatpush.msra.mxu0 %v369
        %525 = vmatpush.msra.mxu0 %v367
        %526 = vmatpush.msra.mxu0 %v365
        %527 = vmatpush.msra.mxu0 %v363
        %528 = vmatpush.msra.mxu0 %v361
        %529 = vmatpush.msra.mxu0 %v359
        %530 = vmatpush.msra.mxu0 %v357
        %531 = vmatpush.msra.mxu0 %v355
        %532 = vmatpush.msra.mxu0 %v353
        %533 = vmatpush.msra.mxu0 %v351
        %534 = vmatpush.msra.mxu0 %v349
        %535 = vmatmul.f32.gmra.mxu0 %v333
        %v536 = vpop.f32.mrf.mxu0
        %v537 = vadd.f32 %v447, %v536
        %538 = vmatmul.f32.gmra.mxu0 %v334
        %v539 = vpop.f32.mrf.mxu0
        %v540 = vadd.f32 %v447, %v539
        %541 = vdwg.mxu0
        %542 = vmatpush.msra.mxu0 %v411
        %543 = vmatpush.msra.mxu0 %v409
        %544 = vmatpush.msra.mxu0 %v407
        %545 = vmatpush.msra.mxu0 %v405
        %546 = vmatpush.msra.mxu0 %v403
        %547 = vmatpush.msra.mxu0 %v401
        %548 = vmatpush.msra.mxu0 %v399
        %549 = vmatpush.msra.mxu0 %v397
        %550 = vmatpush.msra.mxu0 %v395
        %551 = vmatpush.msra.mxu0 %v393
        %552 = vmatpush.msra.mxu0 %v391
        %553 = vmatpush.msra.mxu0 %v389
        %554 = vmatpush.msra.mxu0 %v387
        %555 = vmatpush.msra.mxu0 %v385
        %556 = vmatpush.msra.mxu0 %v383
        %557 = vmatpush.msra.mxu0 %v381
        %558 = vmatmul.f32.gmra.mxu0 %v346
        %v559 = vpop.f32.mrf.mxu0
        %v560 = vadd.f32 %v537, %v559
        %561 = vmatmul.f32.gmra.mxu0 %v347
        %v562 = vpop.f32.mrf.mxu0
        %v563 = vadd.f32 %v540, %v562
        %564 = vdwg.mxu0
        %565 = vmatpush.msra.mxu0 %v443
        %566 = vmatpush.msra.mxu0 %v441
        %567 = vmatpush.msra.mxu0 %v439
        %568 = vmatpush.msra.mxu0 %v437
        %569 = vmatpush.msra.mxu0 %v435
        %570 = vmatpush.msra.mxu0 %v433
        %571 = vmatpush.msra.mxu0 %v431
        %572 = vmatpush.msra.mxu0 %v429
        %573 = vmatpush.msra.mxu0 %v427
        %574 = vmatpush.msra.mxu0 %v425
        %575 = vmatpush.msra.mxu0 %v423
        %576 = vmatpush.msra.mxu0 %v421
        %577 = vmatpush.msra.mxu0 %v419
        %578 = vmatpush.msra.mxu0 %v417
        %579 = vmatpush.msra.mxu0 %v415
        %580 = vmatpush.msra.mxu0 %v413
        %581 = vmatmul.f32.gmra.mxu0 %v293
        %v582 = vpop.f32.mrf.mxu0
        %v583 = vadd.f32 %v560, %v582
        %584 = vmatmul.f32.gmra.mxu0 %v294
        %v585 = vpop.f32.mrf.mxu0
        %v586 = vadd.f32 %v563, %v585
        %587 = vdwg.mxu0
        %v588 = vmax.f32 %v514, 0.0
        %v589 = vmax.f32 %v517, 0.0
        %v590 = vrot.slane %v588, 4
        %v591 = vrot.slane %v589, 4
        %vm592 = vcmp.lt.s32.totalorder %v296, 4
        %v593 = vsel %vm592, %v590, %v591
        %v594 = vsel %vm592, %v591, %v590
        %vm595 = vcmp.ge.s32.totalorder %v320, 4
        %vm596 = vcmp.ge.s32.totalorder %v321, 4
        %v597 = vsel %vm595, 1, 0
        %v598 = vsel %vm596, 1, 0
        %vm599 = vcmp.eq.s32.totalorder %v597, 1
        %vm600 = vcmp.eq.s32.totalorder %v598, 1
        %v601 = vsel %vm599, %v594, 0.0
        %v602 = vsel %vm600, %v593, 0.0
        %v603 = vrot.slane %v588, 6
        %v604 = vrot.slane %v589, 6
        %v605 = vsel %vm324, %v603, %v604
        %v606 = vsel %vm324, %v604, %v603
        %v607 = vsel %vm331, %v606, 0.0
        %v608 = vsel %vm332, %v605, 0.0
        %v609 = vld [vmem:[#allocation8] sm:$0xff]
        %v610 = vld [vmem:[#allocation8 + $0x8] sm:$0xff]
        %v611 = vld [vmem:[#allocation8 + $0x10] sm:$0xff]
        %v612 = vld [vmem:[#allocation8 + $0x18] sm:$0xff]
        %v613 = vld [vmem:[#allocation8 + $0x20] sm:$0xff]
        %v614 = vld [vmem:[#allocation8 + $0x28] sm:$0xff]
        %v615 = vld [vmem:[#allocation8 + $0x30] sm:$0xff]
        %v616 = vld [vmem:[#allocation8 + $0x38] sm:$0xff]
        %v617 = vld [vmem:[#allocation8 + $0x40] sm:$0xff]
        %v618 = vld [vmem:[#allocation8 + $0x48] sm:$0xff]
        %v619 = vld [vmem:[#allocation8 + $0x50] sm:$0xff]
        %v620 = vld [vmem:[#allocation8 + $0x58] sm:$0xff]
        %v621 = vld [vmem:[#allocation8 + $0x60] sm:$0xff]
        %v622 = vld [vmem:[#allocation8 + $0x68] sm:$0xff]
        %v623 = vld [vmem:[#allocation8 + $0x70] sm:$0xff]
        %v624 = vld [vmem:[#allocation8 + $0x78] sm:$0xff]
        %v625 = vld [vmem:[#allocation8 + $0x80] sm:$0xff]
        %v626 = vld [vmem:[#allocation8 + $0x88] sm:$0xff]
        %v627 = vld [vmem:[#allocation8 + $0x90] sm:$0xff]
        %v628 = vld [vmem:[#allocation8 + $0x98] sm:$0xff]
        %v629 = vld [vmem:[#allocation8 + $0xa0] sm:$0xff]
        %v630 = vld [vmem:[#allocation8 + $0xa8] sm:$0xff]
        %v631 = vld [vmem:[#allocation8 + $0xb0] sm:$0xff]
        %v632 = vld [vmem:[#allocation8 + $0xb8] sm:$0xff]
        %v633 = vld [vmem:[#allocation8 + $0xc0] sm:$0xff]
        %v634 = vld [vmem:[#allocation8 + $0xc8] sm:$0xff]
        %v635 = vld [vmem:[#allocation8 + $0xd0] sm:$0xff]
        %v636 = vld [vmem:[#allocation8 + $0xd8] sm:$0xff]
        %v637 = vld [vmem:[#allocation8 + $0xe0] sm:$0xff]
        %v638 = vld [vmem:[#allocation8 + $0xe8] sm:$0xff]
        %v639 = vld [vmem:[#allocation8 + $0xf0] sm:$0xff]
        %v640 = vld [vmem:[#allocation8 + $0xf8] sm:$0xff]
        %v641 = vld [vmem:[#allocation8 + $0x100] sm:$0xff]
        %v642 = vld [vmem:[#allocation8 + $0x108] sm:$0xff]
        %v643 = vld [vmem:[#allocation8 + $0x110] sm:$0xff]
        %v644 = vld [vmem:[#allocation8 + $0x118] sm:$0xff]
        %v645 = vld [vmem:[#allocation8 + $0x120] sm:$0xff]
        %v646 = vld [vmem:[#allocation8 + $0x128] sm:$0xff]
        %v647 = vld [vmem:[#allocation8 + $0x130] sm:$0xff]
        %v648 = vld [vmem:[#allocation8 + $0x138] sm:$0xff]
        %v649 = vld [vmem:[#allocation8 + $0x140] sm:$0xff]
        %v650 = vld [vmem:[#allocation8 + $0x148] sm:$0xff]
        %v651 = vld [vmem:[#allocation8 + $0x150] sm:$0xff]
        %v652 = vld [vmem:[#allocation8 + $0x158] sm:$0xff]
        %v653 = vld [vmem:[#allocation8 + $0x160] sm:$0xff]
        %v654 = vld [vmem:[#allocation8 + $0x168] sm:$0xff]
        %v655 = vld [vmem:[#allocation8 + $0x170] sm:$0xff]
        %v656 = vld [vmem:[#allocation8 + $0x178] sm:$0xff]
        %v657 = vld [vmem:[%s4] sm:$0x1]
        %v659 = vperm.slane %v657, 0
        %661 = vmatpush.msra.mxu0 %v624
        %662 = vmatpush.msra.mxu0 %v623
        %663 = vmatpush.msra.mxu0 %v622
        %664 = vmatpush.msra.mxu0 %v621
        %665 = vmatpush.msra.mxu0 %v620
        %666 = vmatpush.msra.mxu0 %v619
        %667 = vmatpush.msra.mxu0 %v618
        %668 = vmatpush.msra.mxu0 %v617
        %669 = vmatpush.msra.mxu0 %v616
        %670 = vmatpush.msra.mxu0 %v615
        %671 = vmatpush.msra.mxu0 %v614
        %672 = vmatpush.msra.mxu0 %v613
        %673 = vmatpush.msra.mxu0 %v612
        %674 = vmatpush.msra.mxu0 %v611
        %675 = vmatpush.msra.mxu0 %v610
        %676 = vmatpush.msra.mxu0 %v609
        %677 = vmatmul.f32.gmra.mxu0 %v601
        %v678 = vpop.f32.mrf.mxu0
        %v679 = vadd.f32 %v659, %v678
        %680 = vmatmul.f32.gmra.mxu0 %v602
        %v681 = vpop.f32.mrf.mxu0
        %v682 = vadd.f32 %v659, %v681
        %683 = vdwg.mxu0
        %684 = vmatpush.msra.mxu0 %v640
        %685 = vmatpush.msra.mxu0 %v639
        %686 = vmatpush.msra.mxu0 %v638
        %687 = vmatpush.msra.mxu0 %v637
        %688 = vmatpush.msra.mxu0 %v636
        %689 = vmatpush.msra.mxu0 %v635
        %690 = vmatpush.msra.mxu0 %v634
        %691 = vmatpush.msra.mxu0 %v633
        %692 = vmatpush.msra.mxu0 %v632
        %693 = vmatpush.msra.mxu0 %v631
        %694 = vmatpush.msra.mxu0 %v630
        %695 = vmatpush.msra.mxu0 %v629
        %696 = vmatpush.msra.mxu0 %v628
        %697 = vmatpush.msra.mxu0 %v627
        %698 = vmatpush.msra.mxu0 %v626
        %699 = vmatpush.msra.mxu0 %v625
        %700 = vmatmul.f32.gmra.mxu0 %v607
        %v701 = vpop.f32.mrf.mxu0
        %v702 = vadd.f32 %v679, %v701
        %703 = vmatmul.f32.gmra.mxu0 %v608
        %v704 = vpop.f32.mrf.mxu0
        %v705 = vadd.f32 %v682, %v704
        %706 = vdwg.mxu0
        %707 = vmatpush.msra.mxu0 %v656
        %708 = vmatpush.msra.mxu0 %v655
        %709 = vmatpush.msra.mxu0 %v654
        %710 = vmatpush.msra.mxu0 %v653
        %711 = vmatpush.msra.mxu0 %v652
        %712 = vmatpush.msra.mxu0 %v651
        %713 = vmatpush.msra.mxu0 %v650
        %714 = vmatpush.msra.mxu0 %v649
        %715 = vmatpush.msra.mxu0 %v648
        %716 = vmatpush.msra.mxu0 %v647
        %717 = vmatpush.msra.mxu0 %v646
        %718 = vmatpush.msra.mxu0 %v645
        %719 = vmatpush.msra.mxu0 %v644
        %720 = vmatpush.msra.mxu0 %v643
        %721 = vmatpush.msra.mxu0 %v642
        %722 = vmatpush.msra.mxu0 %v641
        %723 = vmatmul.f32.gmra.mxu0 %v588
        %v724 = vpop.f32.mrf.mxu0
        %v725 = vadd.f32 %v702, %v724
        %726 = vmatmul.f32.gmra.mxu0 %v589
        %v727 = vpop.f32.mrf.mxu0
        %v728 = vadd.f32 %v705, %v727
        %729 = vdwg.mxu0
        %v730 = vmax.f32 %v725, 0.0
        %v731 = vmax.f32 %v728, 0.0
        %v732 = vadd.f32 %v730, %v583
        %v733 = vadd.f32 %v731, %v586
        %v734 = vmax.f32 %v732, 0.0
        %v735 = vmax.f32 %v733, 0.0
        %736 = vst [vmem:[%s292] sm:$0xff] %v734
        %737 = vst [vmem:[%s292 + $0x8] sm:$0xff] %v735
        %s738 = sand.u32 %s142, 1
        %s739 = scalar_lea.sflag [#allocation4], %s738
        %s740 = sand.u32 %s142, 1
        %s741 = smul.addr %s740, 16
        %s742 = scalar_lea.vmem [#allocation10], %s741
        // Predicated region
        $region57: #{tpu_custom_call.1} parent=39 // pred_check
          %p743 = pneg %p152
        $region58: #{tpu_custom_call.1} parent=39 // pred_check_branch
          %745 = sbr.rel (%p743) target = $region60
        $region59: #{tpu_custom_call.1} parent=39 // pred_region
          %747 = vsyncadd %s739, 0
          %s748 = smul.addr %s24, 2
          %s749 = smul.addr %s748, 8
          %s750 = scalar_lea.hbm %s5, %s749
          %s751 = sshll.u32 %s742, 4
          %s752 = int_to_ptr.vmem [resolvable:$true] %s751
          %s753 = sshll.u32 %s750, 4
          %s754 = int_to_ptr.hbm [resolvable:$true] %s753
          %759 = dma.vmem_to_hbm [thread:$0]  %s752, 256, %s754, %s739, 128, 128, 8
        $region60: #{tpu_custom_call.1} parent=39 // pred_fallthru
          _
      $region40: #{tpu_custom_call.1} parent=5 // pred_fallthru
        _
      %p760 = scmp.le.s32.totalorder 2, %s19
      // Predicated region
      $region61: #{tpu_custom_call.1} parent=5 // pred_check
        %p761 = pneg %p760
      $region62: #{tpu_custom_call.1} parent=5 // pred_check_branch
        %763 = sbr.rel (%p761) target = $region64
      $region63: #{tpu_custom_call.1} parent=5 // pred_region
        %s764 = ssub.s32 %s19, 2
        // Predicated region
        $region65: #{tpu_custom_call.1} parent=63 // pred_check
          %p765 = pneg %p158
        $region66: #{tpu_custom_call.1} parent=63 // pred_check_branch
          %767 = sbr.rel (%p765) target = $region68
        $region67: #{tpu_custom_call.1} parent=63 // pred_region
          %s768 = sand.u32 %s143, 1
          %s769 = scalar_lea.sflag [#allocation4], %s768
          %s770 = sand.u32 %s143, 1
          %s771 = smul.addr %s770, 16
          %s772 = scalar_lea.vmem [#allocation10], %s771
          %774 = dma.done %s769, 256
        $region68: #{tpu_custom_call.1} parent=63 // pred_fallthru
          _
      $region64: #{tpu_custom_call.1} parent=5 // pred_fallthru
        _
    $region6: #{tpu_custom_call.1} parent=1 // loop_footer
      %s23 = sadd.s32 1, %s19
    $region7: #{tpu_custom_call.1} parent=1 // loop_footer_branch
      %18 = sbr.rel target = $region3
    $region8: #{tpu_custom_call.1} parent=1 // loop_exit
      _
    %775 = vsyncpa [#allocation3], 1
    %s776 = scalar_lea.sflag [#allocation3], 1
    %777 = vsyncpa %s776, 1
    %778 = vsyncpa [#allocation6], 1
    %779 = vsyncpa [#allocation9], 1
    %780 = vsyncpa [#allocation4], 1
    %s781 = scalar_lea.sflag [#allocation4], 1
    %782 = vsyncpa %s781, 1

</llo_original>
